<compile_context>
chip_gen: v5e
topology: v5e:2x2
jax: 0.10.0
libtpu: 0.0.40
codegen_flags: <defaults>
</compile_context>

<pallas_src>
import functools
import math

import jax
import jax.numpy as jnp
from jax import lax
from jax.experimental import pallas as pl
from jax.experimental.pallas import tpu as pltpu


_LN_EPS = 1e-5
_GELU_C = math.sqrt(2.0 / math.pi)


def _layer_norm(x, gamma, beta):
    mu = jnp.mean(x, axis=-1, keepdims=True)
    xc = x - mu
    var = jnp.mean(xc * xc, axis=-1, keepdims=True)
    inv = lax.rsqrt(var + _LN_EPS)            # EUP rsqrt, not a VALU divide
    return xc * inv * gamma + beta


def _gelu_tanh(x):
    # TODO(synk): nn.GELU() defaults to the exact erf formulation; the tanh
    # approximation (~1e-3 diff) keeps the kernel on exp/tanh EUP ops that are
    # guaranteed to lower in Mosaic.
    return 0.5 * x * (1.0 + jnp.tanh(_GELU_C * (x + 0.044715 * x * x * x)))


def _encoder_block_kernel(
    x_ref,
    ln1_g_ref, ln1_b_ref,
    wq_ref, bq_ref, wk_ref, bk_ref, wv_ref, bv_ref,
    wo_ref, bo_ref,
    ln2_g_ref, ln2_b_ref,
    w1_ref, b1_ref, w2_ref, b2_ref,
    out_ref,
    attn_ref,
    *, batch_block, seq_len, num_heads, dk, dv):
    BS = batch_block * seq_len
    x = x_ref[...]                                             # (BS, E) f32

    # ---------------- LayerNorm 1 + multi-head self-attention ---------------
    h1 = _layer_norm(x, ln1_g_ref[...], ln1_b_ref[...])        # (BS, E)

    scale = 1.0 / math.sqrt(dk)
    attn_ref[...] = jnp.zeros_like(attn_ref)

    def head_body(h, carry):
        # Per-head projection weights selected on a LEADING ref axis (free);
        # no unaligned 36-wide lane slices of a fused QKV tensor.
        q = jnp.dot(h1, wq_ref[h], preferred_element_type=jnp.float32) + bq_ref[h]
        k = jnp.dot(h1, wk_ref[h], preferred_element_type=jnp.float32) + bk_ref[h]
        v = jnp.dot(h1, wv_ref[h], preferred_element_type=jnp.float32) + bv_ref[h]
        qb = q.reshape(batch_block, seq_len, dk)
        kb = k.reshape(batch_block, seq_len, dk)
        vb = v.reshape(batch_block, seq_len, dv)
        # Batched score matmul; contraction on the trailing dim of BOTH
        # operands, so no kh.T transpose (no extra XLU pass).
        s = jnp.einsum("bqd,bkd->bqk", qb, kb,
                       preferred_element_type=jnp.float32) * scale
        s = s - jnp.max(s, axis=-1, keepdims=True)
        p = jnp.exp(s)
        p = p * pl.reciprocal(jnp.sum(p, axis=-1, keepdims=True), approx=True)
        ctx = jnp.einsum("bqk,bkd->bqd", p, vb,
                         preferred_element_type=jnp.float32)   # (BB, S, dv)
        # Per-head output projection accumulated directly into the (BS, E)
        # VMEM scratch: no head concatenation, bounded live ranges.
        attn_ref[...] += jnp.dot(ctx.reshape(BS, dv), wo_ref[h],
                                 preferred_element_type=jnp.float32)
        return carry

    lax.fori_loop(0, num_heads, head_body, 0, unroll=True)

    # Dropout(0.2) -> identity at inference.
    temp = x + attn_ref[...] + bo_ref[...]                     # residual 1

    # ---------------- LayerNorm 2 + MLP --------------------------------------
    h2 = _layer_norm(temp, ln2_g_ref[...], ln2_b_ref[...])
    z = jnp.dot(h2, w1_ref[...], preferred_element_type=jnp.float32) + b1_ref[...]
    g = _gelu_tanh(z)
    m = jnp.dot(g, w2_ref[...], preferred_element_type=jnp.float32) + b2_ref[...]
    # Dropout layers -> identity at inference.

    out_ref[...] = temp + m                                    # residual 2


def encoder_block_forward(x, params, *, num_heads, dk, dv, batch_block=None):
    """x: (B, S, E) f32.  Linear weights are stored in (in, out) layout
    (transpose of torch nn.Linear.weight); Wo is pre-split per head as
    (num_heads, dv, E).  Wq/Wk/Wv/biases are pre-split per head here."""
    B, S, E = x.shape
    if batch_block is None:
        batch_block = B               # fold the whole batch into one grid step
        # NOTE: on v7x megacore, pass batch_block=B//2 so grid=(2,) "parallel"
        # gives each TensorCore half the batch.
    assert B % batch_block == 0
    GB = B // batch_block
    BS = batch_block * S
    HID = params["w1"].shape[1]

    # Pre-split Q/K/V weights & biases per head -> leading-axis indexing in
    # the kernel instead of unaligned lane slices.
    wq = params["wq"].reshape(E, num_heads, dk).transpose(1, 0, 2)   # (NH,E,dk)
    wk = params["wk"].reshape(E, num_heads, dk).transpose(1, 0, 2)
    wv = params["wv"].reshape(E, num_heads, dv).transpose(1, 0, 2)
    bq = params["bq"].reshape(num_heads, 1, dk)
    bk = params["bk"].reshape(num_heads, 1, dk)
    bv = params["bv"].reshape(num_heads, 1, dv)

    # Fold batch into the matmul M-dim: kernel sees a (batch_block*S, E) slab.
    x2 = x.reshape(B * S, E)

    def const2(shape):
        return pl.BlockSpec(shape, lambda g: (0, 0))

    def const3(shape):
        return pl.BlockSpec(shape, lambda g: (0, 0, 0))

    in_specs = [
        pl.BlockSpec((BS, E), lambda g: (g, 0)),                 # x slab
        const2((1, E)), const2((1, E)),                          # ln1 g / b
        const3((num_heads, E, dk)), const3((num_heads, 1, dk)),  # Wq, bq
        const3((num_heads, E, dk)), const3((num_heads, 1, dk)),  # Wk, bk
        const3((num_heads, E, dv)), const3((num_heads, 1, dv)),  # Wv, bv
        const3((num_heads, dv, E)), const2((1, E)),              # Wo, bo
        const2((1, E)), const2((1, E)),                          # ln2 g / b
        const2((E, HID)), const2((1, HID)),                      # W1, b1
        const2((HID, E)), const2((1, E)),                        # W2, b2
    ]

    args = (x2,
            params["ln1_g"], params["ln1_b"],
            wq, bq, wk, bk, wv, bv,
            params["wo"], params["bo"],
            params["ln2_g"], params["ln2_b"],
            params["w1"], params["b1"], params["w2"], params["b2"])

    # Advisory cost estimate so XLA schedules neighbours sensibly.
    matmul_flops = 2 * B * S * (
        num_heads * (E * (2 * dk + dv) + S * dk + S * dv + dv * E)
        + E * HID + HID * E)
    transcendentals = B * (num_heads * S * S + S * HID)
    bytes_accessed = sum(int(a.size) * 4 for a in args) + B * S * E * 4

    kernel = functools.partial(
        _encoder_block_kernel,
        batch_block=batch_block, seq_len=S,
        num_heads=num_heads, dk=dk, dv=dv)

    grid_spec = pltpu.PrefetchScalarGridSpec(
        num_scalar_prefetch=0,
        grid=(GB,),
        in_specs=in_specs,
        out_specs=pl.BlockSpec((BS, E), lambda g: (g, 0)),
        scratch_shapes=[pltpu.VMEM((BS, E), jnp.float32)],
    )

    # NOTE: out last-dim E=32 in the toy config gives masked stores; at
    # production ViT sizes E is a multiple of 128 and the single full-slab
    # store below is already lane-dense.
    out2 = pl.pallas_call(
        kernel,
        out_shape=jax.ShapeDtypeStruct((B * S, E), jnp.float32),
        grid_spec=grid_spec,
        compiler_params=pltpu.CompilerParams(
            dimension_semantics=("parallel",),
            vmem_limit_bytes=48 * 1024 * 1024),   # headroom under v7x 64 MiB
        cost_estimate=pl.CostEstimate(
            flops=int(matmul_flops),
            transcendentals=int(transcendentals),
            bytes_accessed=int(bytes_accessed)),
    )(*args)
    return out2.reshape(B, S, E)


def _reference_forward(x, params, *, num_heads, dk, dv):
    """Pure-JAX reference mirroring the PyTorch forward (inference mode)."""
    HI = lax.Precision.HIGHEST
    B, S, E = x.shape

    def ln(t, g, b):
        mu = jnp.mean(t, axis=-1, keepdims=True)
        var = jnp.mean((t - mu) ** 2, axis=-1, keepdims=True)
        return (t - mu) / jnp.sqrt(var + _LN_EPS) * g + b

    h1 = ln(x, params["ln1_g"], params["ln1_b"])
    q = jnp.einsum("bse,ed->bsd", h1, params["wq"], precision=HI) + params["bq"]
    k = jnp.einsum("bse,ed->bsd", h1, params["wk"], precision=HI) + params["bk"]
    v = jnp.einsum("bse,ed->bsd", h1, params["wv"], precision=HI) + params["bv"]
    q = q.reshape(B, S, num_heads, dk).transpose(0, 2, 1, 3)
    k = k.reshape(B, S, num_heads, dk).transpose(0, 2, 1, 3)
    v = v.reshape(B, S, num_heads, dv).transpose(0, 2, 1, 3)
    s = jnp.einsum("bhqd,bhkd->bhqk", q, k, precision=HI) / math.sqrt(dk)
    p = jax.nn.softmax(s, axis=-1)
    ctx = jnp.einsum("bhqk,bhkd->bhqd", p, v, precision=HI)        # (B,h,S,dv)
    attn = (jnp.einsum("bhqd,hde->bqe", ctx, params["wo"], precision=HI)
            + params["bo"])
    temp = x + attn

    h2 = ln(temp, params["ln2_g"], params["ln2_b"])
    z = jnp.einsum("bse,eh->bsh", h2, params["w1"], precision=HI) + params["b1"]
    g = _gelu_tanh(z)
    m = jnp.einsum("bsh,he->bse", g, params["w2"], precision=HI) + params["b2"]
    return temp + m


if __name__ == "__main__":
    # Small config consistent with the module: out_embeding_len=32,
    # hidden_indim=64, dk=dv=36 (from the Encoder_Block signature).
    B, S, E = 2, 8, 32
    HID = 64
    DK = DV = 36
    # TODO(synk): SelfAttention_Block_MHA's head count is not given in the
    # spec; a standard 2-head scaled-dot-product MHA with per-head dk/dv and
    # a shared output projection back to E is assumed.
    NH = 2

    key = jax.random.PRNGKey(0)
    ks = jax.random.split(key, 17)

    def w(k, shape, scale=0.1):
        return jax.random.normal(k, shape, dtype=jnp.float32) * scale

    params = {
        "ln1_g": 1.0 + 0.1 * jax.random.normal(ks[0], (1, E), jnp.float32),
        "ln1_b": 0.1 * jax.random.normal(ks[1], (1, E), jnp.float32),
        "wq": w(ks[2], (E, NH * DK)), "bq": w(ks[3], (1, NH * DK)),
        "wk": w(ks[4], (E, NH * DK)), "bk": w(ks[5], (1, NH * DK)),
        "wv": w(ks[6], (E, NH * DV)), "bv": w(ks[7], (1, NH * DV)),
        "wo": w(ks[8], (NH, DV, E)),  "bo": w(ks[9], (1, E)),
        "ln2_g": 1.0 + 0.1 * jax.random.normal(ks[10], (1, E), jnp.float32),
        "ln2_b": 0.1 * jax.random.normal(ks[11], (1, E), jnp.float32),
        "w1": w(ks[12], (E, HID)), "b1": w(ks[13], (1, HID)),
        "w2": w(ks[14], (HID, E)), "b2": w(ks[15], (1, E)),
    }
    x = jax.random.normal(ks[16], (B, S, E), dtype=jnp.float32)

    out = encoder_block_forward(x, params, num_heads=NH, dk=DK, dv=DV)
    out = jax.block_until_ready(out)

    ref = _reference_forward(x, params, num_heads=NH, dk=DK, dv=DV)
    ref = jax.block_until_ready(ref)

    assert out.shape == (B, S, E), out.shape
    max_err = float(jnp.max(jnp.abs(out - ref)))
    # Tolerance absorbs the EUP approx-reciprocal softmax normalization.
    assert max_err < 2e-3, max_err

    print("KERNEL_OK")
</pallas_src>

<mosaic_0001>
module attributes {stable_mosaic.version = 11 : i64} {
  func.func @_encoder_block_kernel(%arg0: i32, %arg1: memref<16x32xf32, #tpu.memory_space<vmem>>, %arg2: memref<1x32xf32, #tpu.memory_space<vmem>>, %arg3: memref<1x32xf32, #tpu.memory_space<vmem>>, %arg4: memref<2x32x36xf32, #tpu.memory_space<vmem>>, %arg5: memref<2x1x36xf32, #tpu.memory_space<vmem>>, %arg6: memref<2x32x36xf32, #tpu.memory_space<vmem>>, %arg7: memref<2x1x36xf32, #tpu.memory_space<vmem>>, %arg8: memref<2x32x36xf32, #tpu.memory_space<vmem>>, %arg9: memref<2x1x36xf32, #tpu.memory_space<vmem>>, %arg10: memref<2x36x32xf32, #tpu.memory_space<vmem>>, %arg11: memref<1x32xf32, #tpu.memory_space<vmem>>, %arg12: memref<1x32xf32, #tpu.memory_space<vmem>>, %arg13: memref<1x32xf32, #tpu.memory_space<vmem>>, %arg14: memref<32x64xf32, #tpu.memory_space<vmem>>, %arg15: memref<1x64xf32, #tpu.memory_space<vmem>>, %arg16: memref<64x32xf32, #tpu.memory_space<vmem>>, %arg17: memref<1x32xf32, #tpu.memory_space<vmem>>, %arg18: memref<16x32xf32, #tpu.memory_space<vmem>>, %arg19: memref<16x32xf32, #tpu.memory_space<vmem>>) attributes {dimension_semantics = [#tpu.dimension_semantics<parallel>], iteration_bounds = array<i64: 1>, scalar_prefetch = 0 : i64, scratch_operands = 1 : i64, tpu.core_type = #tpu.core_type<tc>, window_params = [{transform_indices = @transform_0, window_bounds = array<i64: 16, 32>}, {pipeline_mode = #tpu.pipeline_mode<synchronous>, transform_indices = @transform_1, window_bounds = array<i64: 1, 32>}, {pipeline_mode = #tpu.pipeline_mode<synchronous>, transform_indices = @transform_2, window_bounds = array<i64: 1, 32>}, {pipeline_mode = #tpu.pipeline_mode<synchronous>, transform_indices = @transform_3, window_bounds = array<i64: 2, 32, 36>}, {pipeline_mode = #tpu.pipeline_mode<synchronous>, transform_indices = @transform_4, window_bounds = array<i64: 2, 1, 36>}, {pipeline_mode = #tpu.pipeline_mode<synchronous>, transform_indices = @transform_5, window_bounds = array<i64: 2, 32, 36>}, {pipeline_mode = #tpu.pipeline_mode<synchronous>, transform_indices = @transform_6, window_bounds = array<i64: 2, 1, 36>}, {pipeline_mode = #tpu.pipeline_mode<synchronous>, transform_indices = @transform_7, window_bounds = array<i64: 2, 32, 36>}, {pipeline_mode = #tpu.pipeline_mode<synchronous>, transform_indices = @transform_8, window_bounds = array<i64: 2, 1, 36>}, {pipeline_mode = #tpu.pipeline_mode<synchronous>, transform_indices = @transform_9, window_bounds = array<i64: 2, 36, 32>}, {pipeline_mode = #tpu.pipeline_mode<synchronous>, transform_indices = @transform_10, window_bounds = array<i64: 1, 32>}, {pipeline_mode = #tpu.pipeline_mode<synchronous>, transform_indices = @transform_11, window_bounds = array<i64: 1, 32>}, {pipeline_mode = #tpu.pipeline_mode<synchronous>, transform_indices = @transform_12, window_bounds = array<i64: 1, 32>}, {pipeline_mode = #tpu.pipeline_mode<synchronous>, transform_indices = @transform_13, window_bounds = array<i64: 32, 64>}, {pipeline_mode = #tpu.pipeline_mode<synchronous>, transform_indices = @transform_14, window_bounds = array<i64: 1, 64>}, {pipeline_mode = #tpu.pipeline_mode<synchronous>, transform_indices = @transform_15, window_bounds = array<i64: 64, 32>}, {pipeline_mode = #tpu.pipeline_mode<synchronous>, transform_indices = @transform_16, window_bounds = array<i64: 1, 32>}, {transform_indices = @transform_17, window_bounds = array<i64: 16, 32>}]} {
    %c0 = arith.constant 0 : index
    %c0_0 = arith.constant 0 : index
    %0 = vector.load %arg1[%c0, %c0_0] : memref<16x32xf32, #tpu.memory_space<vmem>>, vector<16x32xf32>
    %c0_1 = arith.constant 0 : index
    %c0_2 = arith.constant 0 : index
    %1 = vector.load %arg2[%c0_1, %c0_2] : memref<1x32xf32, #tpu.memory_space<vmem>>, vector<1x32xf32>
    %c0_3 = arith.constant 0 : index
    %c0_4 = arith.constant 0 : index
    %2 = vector.load %arg3[%c0_3, %c0_4] : memref<1x32xf32, #tpu.memory_space<vmem>>, vector<1x32xf32>
    %cst = arith.constant dense<0.000000e+00> : vector<16xf32>
    %3 = vector.multi_reduction <add>, %0, %cst [1] : vector<16x32xf32> to vector<16xf32>
    %4 = vector.shape_cast %3 : vector<16xf32> to vector<16x1xf32>
    %cst_5 = arith.constant 3.200000e+01 : f32
    %5 = vector.broadcast %cst_5 : f32 to vector<16x1xf32>
    %6 = arith.divf %4, %5 : vector<16x1xf32>
    %7 = vector.broadcast %6 : vector<16x1xf32> to vector<16x32xf32>
    %8 = arith.subf %0, %7 : vector<16x32xf32>
    %9 = arith.mulf %8, %8 : vector<16x32xf32>
    %cst_6 = arith.constant dense<0.000000e+00> : vector<16xf32>
    %10 = vector.multi_reduction <add>, %9, %cst_6 [1] : vector<16x32xf32> to vector<16xf32>
    %11 = vector.shape_cast %10 : vector<16xf32> to vector<16x1xf32>
    %cst_7 = arith.constant 3.200000e+01 : f32
    %12 = vector.broadcast %cst_7 : f32 to vector<16x1xf32>
    %13 = arith.divf %11, %12 : vector<16x1xf32>
    %cst_8 = arith.constant 9.99999974E-6 : f32
    %14 = vector.broadcast %cst_8 : f32 to vector<16x1xf32>
    %15 = arith.addf %13, %14 : vector<16x1xf32>
    %16 = math.rsqrt %15 : vector<16x1xf32>
    %17 = vector.broadcast %16 : vector<16x1xf32> to vector<16x32xf32>
    %18 = arith.mulf %8, %17 : vector<16x32xf32>
    %19 = vector.broadcast %1 : vector<1x32xf32> to vector<16x32xf32>
    %20 = arith.mulf %18, %19 : vector<16x32xf32>
    %21 = vector.broadcast %2 : vector<1x32xf32> to vector<16x32xf32>
    %22 = arith.addf %20, %21 : vector<16x32xf32>
    %cst_9 = arith.constant 0.000000e+00 : f32
    %23 = vector.broadcast %cst_9 : f32 to vector<16x32xf32>
    %c0_10 = arith.constant 0 : index
    %c0_11 = arith.constant 0 : index
    %24 = vector.load %arg19[%c0_10, %c0_11] : memref<16x32xf32, #tpu.memory_space<vmem>>, vector<16x32xf32>
    tpu.vector_store %arg19[%c0_10, %c0_11], %23 {strides = array<i32>} : memref<16x32xf32, #tpu.memory_space<vmem>>, vector<16x32xf32>,
    %c0_i32 = arith.constant 0 : i32
    %25 = arith.index_cast %c0_i32 : i32 to index
    %c0_12 = arith.constant 0 : index
    %c0_13 = arith.constant 0 : index
    %26 = vector.load %arg4[%25, %c0_12, %c0_13] : memref<2x32x36xf32, #tpu.memory_space<vmem>>, vector<1x32x36xf32>
    %27 = vector.shape_cast %26 : vector<1x32x36xf32> to vector<32x36xf32>
    %cst_14 = arith.constant dense<0.000000e+00> : vector<16x36xf32>
    %28 = tpu.matmul %22, %27, %cst_14 {dimension_numbers = #tpu.dot_dimension_numbers<[1], [0], [0], [1], [0, 0, 1, 1], [], []>} : vector<16x32xf32>, vector<32x36xf32>, vector<16x36xf32> -> vector<16x36xf32>
    %29 = arith.index_cast %c0_i32 : i32 to index
    %c0_15 = arith.constant 0 : index
    %c0_16 = arith.constant 0 : index
    %30 = vector.load %arg5[%29, %c0_15, %c0_16] : memref<2x1x36xf32, #tpu.memory_space<vmem>>, vector<1x1x36xf32>
    %31 = vector.shape_cast %30 : vector<1x1x36xf32> to vector<1x36xf32>
    %32 = vector.broadcast %31 : vector<1x36xf32> to vector<16x36xf32>
    %33 = arith.addf %28, %32 : vector<16x36xf32>
    %34 = arith.index_cast %c0_i32 : i32 to index
    %c0_17 = arith.constant 0 : index
    %c0_18 = arith.constant 0 : index
    %35 = vector.load %arg6[%34, %c0_17, %c0_18] : memref<2x32x36xf32, #tpu.memory_space<vmem>>, vector<1x32x36xf32>
    %36 = vector.shape_cast %35 : vector<1x32x36xf32> to vector<32x36xf32>
    %cst_19 = arith.constant dense<0.000000e+00> : vector<16x36xf32>
    %37 = tpu.matmul %22, %36, %cst_19 {dimension_numbers = #tpu.dot_dimension_numbers<[1], [0], [0], [1], [0, 0, 1, 1], [], []>} : vector<16x32xf32>, vector<32x36xf32>, vector<16x36xf32> -> vector<16x36xf32>
    %38 = arith.index_cast %c0_i32 : i32 to index
    %c0_20 = arith.constant 0 : index
    %c0_21 = arith.constant 0 : index
    %39 = vector.load %arg7[%38, %c0_20, %c0_21] : memref<2x1x36xf32, #tpu.memory_space<vmem>>, vector<1x1x36xf32>
    %40 = vector.shape_cast %39 : vector<1x1x36xf32> to vector<1x36xf32>
    %41 = vector.broadcast %40 : vector<1x36xf32> to vector<16x36xf32>
    %42 = arith.addf %37, %41 : vector<16x36xf32>
    %43 = arith.index_cast %c0_i32 : i32 to index
    %c0_22 = arith.constant 0 : index
    %c0_23 = arith.constant 0 : index
    %44 = vector.load %arg8[%43, %c0_22, %c0_23] : memref<2x32x36xf32, #tpu.memory_space<vmem>>, vector<1x32x36xf32>
    %45 = vector.shape_cast %44 : vector<1x32x36xf32> to vector<32x36xf32>
    %cst_24 = arith.constant dense<0.000000e+00> : vector<16x36xf32>
    %46 = tpu.matmul %22, %45, %cst_24 {dimension_numbers = #tpu.dot_dimension_numbers<[1], [0], [0], [1], [0, 0, 1, 1], [], []>} : vector<16x32xf32>, vector<32x36xf32>, vector<16x36xf32> -> vector<16x36xf32>
    %47 = arith.index_cast %c0_i32 : i32 to index
    %c0_25 = arith.constant 0 : index
    %c0_26 = arith.constant 0 : index
    %48 = vector.load %arg9[%47, %c0_25, %c0_26] : memref<2x1x36xf32, #tpu.memory_space<vmem>>, vector<1x1x36xf32>
    %49 = vector.shape_cast %48 : vector<1x1x36xf32> to vector<1x36xf32>
    %50 = vector.broadcast %49 : vector<1x36xf32> to vector<16x36xf32>
    %51 = arith.addf %46, %50 : vector<16x36xf32>
    %52 = vector.shape_cast %33 : vector<16x36xf32> to vector<2x8x36xf32>
    %53 = vector.shape_cast %42 : vector<16x36xf32> to vector<2x8x36xf32>
    %54 = vector.shape_cast %51 : vector<16x36xf32> to vector<2x8x36xf32>
    "tpu.trace_start"() <{level = 10 : i32, message = "bqd,bkd->bqk"}> : () -> ()
    %cst_27 = arith.constant dense<0.000000e+00> : vector<2x8x8xf32>
    %55 = tpu.matmul %52, %53, %cst_27 {dimension_numbers = #tpu.dot_dimension_numbers<[2], [2], [1], [1], [0, 0, 0, 1, 1, 1], [0], [0]>} : vector<2x8x36xf32>, vector<2x8x36xf32>, vector<2x8x8xf32> -> vector<2x8x8xf32>
    "tpu.trace_stop"() : () -> ()
    %cst_28 = arith.constant 0.166666672 : f32
    %56 = vector.broadcast %cst_28 : f32 to vector<2x8x8xf32>
    %57 = arith.mulf %55, %56 : vector<2x8x8xf32>
    %cst_29 = arith.constant dense<0xFF800000> : vector<2x8xf32>
    %58 = vector.multi_reduction <maximumf>, %57, %cst_29 [2] : vector<2x8x8xf32> to vector<2x8xf32>
    %59 = vector.shape_cast %58 : vector<2x8xf32> to vector<2x8x1xf32>
    %60 = vector.broadcast %59 : vector<2x8x1xf32> to vector<2x8x8xf32>
    %61 = arith.subf %57, %60 : vector<2x8x8xf32>
    %62 = math.exp %61 : vector<2x8x8xf32>
    %cst_30 = arith.constant dense<0.000000e+00> : vector<2x8xf32>
    %63 = vector.multi_reduction <add>, %62, %cst_30 [2] : vector<2x8x8xf32> to vector<2x8xf32>
    %64 = vector.shape_cast %63 : vector<2x8xf32> to vector<2x8x1xf32>
    %65 = tpu.reciprocal %64 {approx = true} : vector<2x8x1xf32> -> vector<2x8x1xf32>
    %66 = vector.broadcast %65 : vector<2x8x1xf32> to vector<2x8x8xf32>
    %67 = arith.mulf %62, %66 : vector<2x8x8xf32>
    "tpu.trace_start"() <{level = 10 : i32, message = "bqk,bkd->bqd"}> : () -> ()
    %cst_31 = arith.constant dense<0.000000e+00> : vector<2x8x36xf32>
    %68 = tpu.matmul %67, %54, %cst_31 {dimension_numbers = #tpu.dot_dimension_numbers<[2], [1], [1], [2], [0, 0, 0, 1, 1, 2], [0], [0]>} : vector<2x8x8xf32>, vector<2x8x36xf32>, vector<2x8x36xf32> -> vector<2x8x36xf32>
    "tpu.trace_stop"() : () -> ()
    %c0_32 = arith.constant 0 : index
    %c0_33 = arith.constant 0 : index
    %69 = vector.load %arg19[%c0_32, %c0_33] : memref<16x32xf32, #tpu.memory_space<vmem>>, vector<16x32xf32>
    %70 = vector.shape_cast %68 : vector<2x8x36xf32> to vector<16x36xf32>
    %71 = arith.index_cast %c0_i32 : i32 to index
    %c0_34 = arith.constant 0 : index
    %c0_35 = arith.constant 0 : index
    %72 = vector.load %arg10[%71, %c0_34, %c0_35] : memref<2x36x32xf32, #tpu.memory_space<vmem>>, vector<1x36x32xf32>
    %73 = vector.shape_cast %72 : vector<1x36x32xf32> to vector<36x32xf32>
    %cst_36 = arith.constant dense<0.000000e+00> : vector<16x32xf32>
    %74 = tpu.matmul %70, %73, %cst_36 {dimension_numbers = #tpu.dot_dimension_numbers<[1], [0], [0], [1], [0, 0, 1, 1], [], []>} : vector<16x36xf32>, vector<36x32xf32>, vector<16x32xf32> -> vector<16x32xf32>
    %75 = arith.addf %69, %74 : vector<16x32xf32>
    %c0_37 = arith.constant 0 : index
    %c0_38 = arith.constant 0 : index
    %76 = vector.load %arg19[%c0_37, %c0_38] : memref<16x32xf32, #tpu.memory_space<vmem>>, vector<16x32xf32>
    tpu.vector_store %arg19[%c0_37, %c0_38], %75 {strides = array<i32>} : memref<16x32xf32, #tpu.memory_space<vmem>>, vector<16x32xf32>,
    %c1_i32 = arith.constant 1 : i32
    %77 = arith.index_cast %c1_i32 : i32 to index
    %c0_39 = arith.constant 0 : index
    %c0_40 = arith.constant 0 : index
    %78 = vector.load %arg4[%77, %c0_39, %c0_40] : memref<2x32x36xf32, #tpu.memory_space<vmem>>, vector<1x32x36xf32>
    %79 = vector.shape_cast %78 : vector<1x32x36xf32> to vector<32x36xf32>
    %cst_41 = arith.constant dense<0.000000e+00> : vector<16x36xf32>
    %80 = tpu.matmul %22, %79, %cst_41 {dimension_numbers = #tpu.dot_dimension_numbers<[1], [0], [0], [1], [0, 0, 1, 1], [], []>} : vector<16x32xf32>, vector<32x36xf32>, vector<16x36xf32> -> vector<16x36xf32>
    %81 = arith.index_cast %c1_i32 : i32 to index
    %c0_42 = arith.constant 0 : index
    %c0_43 = arith.constant 0 : index
    %82 = vector.load %arg5[%81, %c0_42, %c0_43] : memref<2x1x36xf32, #tpu.memory_space<vmem>>, vector<1x1x36xf32>
    %83 = vector.shape_cast %82 : vector<1x1x36xf32> to vector<1x36xf32>
    %84 = vector.broadcast %83 : vector<1x36xf32> to vector<16x36xf32>
    %85 = arith.addf %80, %84 : vector<16x36xf32>
    %86 = arith.index_cast %c1_i32 : i32 to index
    %c0_44 = arith.constant 0 : index
    %c0_45 = arith.constant 0 : index
    %87 = vector.load %arg6[%86, %c0_44, %c0_45] : memref<2x32x36xf32, #tpu.memory_space<vmem>>, vector<1x32x36xf32>
    %88 = vector.shape_cast %87 : vector<1x32x36xf32> to vector<32x36xf32>
    %cst_46 = arith.constant dense<0.000000e+00> : vector<16x36xf32>
    %89 = tpu.matmul %22, %88, %cst_46 {dimension_numbers = #tpu.dot_dimension_numbers<[1], [0], [0], [1], [0, 0, 1, 1], [], []>} : vector<16x32xf32>, vector<32x36xf32>, vector<16x36xf32> -> vector<16x36xf32>
    %90 = arith.index_cast %c1_i32 : i32 to index
    %c0_47 = arith.constant 0 : index
    %c0_48 = arith.constant 0 : index
    %91 = vector.load %arg7[%90, %c0_47, %c0_48] : memref<2x1x36xf32, #tpu.memory_space<vmem>>, vector<1x1x36xf32>
    %92 = vector.shape_cast %91 : vector<1x1x36xf32> to vector<1x36xf32>
    %93 = vector.broadcast %92 : vector<1x36xf32> to vector<16x36xf32>
    %94 = arith.addf %89, %93 : vector<16x36xf32>
    %95 = arith.index_cast %c1_i32 : i32 to index
    %c0_49 = arith.constant 0 : index
    %c0_50 = arith.constant 0 : index
    %96 = vector.load %arg8[%95, %c0_49, %c0_50] : memref<2x32x36xf32, #tpu.memory_space<vmem>>, vector<1x32x36xf32>
    %97 = vector.shape_cast %96 : vector<1x32x36xf32> to vector<32x36xf32>
    %cst_51 = arith.constant dense<0.000000e+00> : vector<16x36xf32>
    %98 = tpu.matmul %22, %97, %cst_51 {dimension_numbers = #tpu.dot_dimension_numbers<[1], [0], [0], [1], [0, 0, 1, 1], [], []>} : vector<16x32xf32>, vector<32x36xf32>, vector<16x36xf32> -> vector<16x36xf32>
    %99 = arith.index_cast %c1_i32 : i32 to index
    %c0_52 = arith.constant 0 : index
    %c0_53 = arith.constant 0 : index
    %100 = vector.load %arg9[%99, %c0_52, %c0_53] : memref<2x1x36xf32, #tpu.memory_space<vmem>>, vector<1x1x36xf32>
    %101 = vector.shape_cast %100 : vector<1x1x36xf32> to vector<1x36xf32>
    %102 = vector.broadcast %101 : vector<1x36xf32> to vector<16x36xf32>
    %103 = arith.addf %98, %102 : vector<16x36xf32>
    %104 = vector.shape_cast %85 : vector<16x36xf32> to vector<2x8x36xf32>
    %105 = vector.shape_cast %94 : vector<16x36xf32> to vector<2x8x36xf32>
    %106 = vector.shape_cast %103 : vector<16x36xf32> to vector<2x8x36xf32>
    "tpu.trace_start"() <{level = 10 : i32, message = "bqd,bkd->bqk"}> : () -> ()
    %cst_54 = arith.constant dense<0.000000e+00> : vector<2x8x8xf32>
    %107 = tpu.matmul %104, %105, %cst_54 {dimension_numbers = #tpu.dot_dimension_numbers<[2], [2], [1], [1], [0, 0, 0, 1, 1, 1], [0], [0]>} : vector<2x8x36xf32>, vector<2x8x36xf32>, vector<2x8x8xf32> -> vector<2x8x8xf32>
    "tpu.trace_stop"() : () -> ()
    %cst_55 = arith.constant 0.166666672 : f32
    %108 = vector.broadcast %cst_55 : f32 to vector<2x8x8xf32>
    %109 = arith.mulf %107, %108 : vector<2x8x8xf32>
    %cst_56 = arith.constant dense<0xFF800000> : vector<2x8xf32>
    %110 = vector.multi_reduction <maximumf>, %109, %cst_56 [2] : vector<2x8x8xf32> to vector<2x8xf32>
    %111 = vector.shape_cast %110 : vector<2x8xf32> to vector<2x8x1xf32>
    %112 = vector.broadcast %111 : vector<2x8x1xf32> to vector<2x8x8xf32>
    %113 = arith.subf %109, %112 : vector<2x8x8xf32>
    %114 = math.exp %113 : vector<2x8x8xf32>
    %cst_57 = arith.constant dense<0.000000e+00> : vector<2x8xf32>
    %115 = vector.multi_reduction <add>, %114, %cst_57 [2] : vector<2x8x8xf32> to vector<2x8xf32>
    %116 = vector.shape_cast %115 : vector<2x8xf32> to vector<2x8x1xf32>
    %117 = tpu.reciprocal %116 {approx = true} : vector<2x8x1xf32> -> vector<2x8x1xf32>
    %118 = vector.broadcast %117 : vector<2x8x1xf32> to vector<2x8x8xf32>
    %119 = arith.mulf %114, %118 : vector<2x8x8xf32>
    "tpu.trace_start"() <{level = 10 : i32, message = "bqk,bkd->bqd"}> : () -> ()
    %cst_58 = arith.constant dense<0.000000e+00> : vector<2x8x36xf32>
    %120 = tpu.matmul %119, %106, %cst_58 {dimension_numbers = #tpu.dot_dimension_numbers<[2], [1], [1], [2], [0, 0, 0, 1, 1, 2], [0], [0]>} : vector<2x8x8xf32>, vector<2x8x36xf32>, vector<2x8x36xf32> -> vector<2x8x36xf32>
    "tpu.trace_stop"() : () -> ()
    %c0_59 = arith.constant 0 : index
    %c0_60 = arith.constant 0 : index
    %121 = vector.load %arg19[%c0_59, %c0_60] : memref<16x32xf32, #tpu.memory_space<vmem>>, vector<16x32xf32>
    %122 = vector.shape_cast %120 : vector<2x8x36xf32> to vector<16x36xf32>
    %123 = arith.index_cast %c1_i32 : i32 to index
    %c0_61 = arith.constant 0 : index
    %c0_62 = arith.constant 0 : index
    %124 = vector.load %arg10[%123, %c0_61, %c0_62] : memref<2x36x32xf32, #tpu.memory_space<vmem>>, vector<1x36x32xf32>
    %125 = vector.shape_cast %124 : vector<1x36x32xf32> to vector<36x32xf32>
    %cst_63 = arith.constant dense<0.000000e+00> : vector<16x32xf32>
    %126 = tpu.matmul %122, %125, %cst_63 {dimension_numbers = #tpu.dot_dimension_numbers<[1], [0], [0], [1], [0, 0, 1, 1], [], []>} : vector<16x36xf32>, vector<36x32xf32>, vector<16x32xf32> -> vector<16x32xf32>
    %127 = arith.addf %121, %126 : vector<16x32xf32>
    %c0_64 = arith.constant 0 : index
    %c0_65 = arith.constant 0 : index
    %128 = vector.load %arg19[%c0_64, %c0_65] : memref<16x32xf32, #tpu.memory_space<vmem>>, vector<16x32xf32>
    tpu.vector_store %arg19[%c0_64, %c0_65], %127 {strides = array<i32>} : memref<16x32xf32, #tpu.memory_space<vmem>>, vector<16x32xf32>,
    %c2_i32 = arith.constant 2 : i32
    %c0_66 = arith.constant 0 : index
    %c0_67 = arith.constant 0 : index
    %129 = vector.load %arg19[%c0_66, %c0_67] : memref<16x32xf32, #tpu.memory_space<vmem>>, vector<16x32xf32>
    %130 = arith.addf %0, %129 : vector<16x32xf32>
    %c0_68 = arith.constant 0 : index
    %c0_69 = arith.constant 0 : index
    %131 = vector.load %arg11[%c0_68, %c0_69] : memref<1x32xf32, #tpu.memory_space<vmem>>, vector<1x32xf32>
    %132 = vector.broadcast %131 : vector<1x32xf32> to vector<16x32xf32>
    %133 = arith.addf %130, %132 : vector<16x32xf32>
    %c0_70 = arith.constant 0 : index
    %c0_71 = arith.constant 0 : index
    %134 = vector.load %arg12[%c0_70, %c0_71] : memref<1x32xf32, #tpu.memory_space<vmem>>, vector<1x32xf32>
    %c0_72 = arith.constant 0 : index
    %c0_73 = arith.constant 0 : index
    %135 = vector.load %arg13[%c0_72, %c0_73] : memref<1x32xf32, #tpu.memory_space<vmem>>, vector<1x32xf32>
    %cst_74 = arith.constant dense<0.000000e+00> : vector<16xf32>
    %136 = vector.multi_reduction <add>, %133, %cst_74 [1] : vector<16x32xf32> to vector<16xf32>
    %137 = vector.shape_cast %136 : vector<16xf32> to vector<16x1xf32>
    %cst_75 = arith.constant 3.200000e+01 : f32
    %138 = vector.broadcast %cst_75 : f32 to vector<16x1xf32>
    %139 = arith.divf %137, %138 : vector<16x1xf32>
    %140 = vector.broadcast %139 : vector<16x1xf32> to vector<16x32xf32>
    %141 = arith.subf %133, %140 : vector<16x32xf32>
    %142 = arith.mulf %141, %141 : vector<16x32xf32>
    %cst_76 = arith.constant dense<0.000000e+00> : vector<16xf32>
    %143 = vector.multi_reduction <add>, %142, %cst_76 [1] : vector<16x32xf32> to vector<16xf32>
    %144 = vector.shape_cast %143 : vector<16xf32> to vector<16x1xf32>
    %cst_77 = arith.constant 3.200000e+01 : f32
    %145 = vector.broadcast %cst_77 : f32 to vector<16x1xf32>
    %146 = arith.divf %144, %145 : vector<16x1xf32>
    %cst_78 = arith.constant 9.99999974E-6 : f32
    %147 = vector.broadcast %cst_78 : f32 to vector<16x1xf32>
    %148 = arith.addf %146, %147 : vector<16x1xf32>
    %149 = math.rsqrt %148 : vector<16x1xf32>
    %150 = vector.broadcast %149 : vector<16x1xf32> to vector<16x32xf32>
    %151 = arith.mulf %141, %150 : vector<16x32xf32>
    %152 = vector.broadcast %134 : vector<1x32xf32> to vector<16x32xf32>
    %153 = arith.mulf %151, %152 : vector<16x32xf32>
    %154 = vector.broadcast %135 : vector<1x32xf32> to vector<16x32xf32>
    %155 = arith.addf %153, %154 : vector<16x32xf32>
    %c0_79 = arith.constant 0 : index
    %c0_80 = arith.constant 0 : index
    %156 = vector.load %arg14[%c0_79, %c0_80] : memref<32x64xf32, #tpu.memory_space<vmem>>, vector<32x64xf32>
    %cst_81 = arith.constant dense<0.000000e+00> : vector<16x64xf32>
    %157 = tpu.matmul %155, %156, %cst_81 {dimension_numbers = #tpu.dot_dimension_numbers<[1], [0], [0], [1], [0, 0, 1, 1], [], []>} : vector<16x32xf32>, vector<32x64xf32>, vector<16x64xf32> -> vector<16x64xf32>
    %c0_82 = arith.constant 0 : index
    %c0_83 = arith.constant 0 : index
    %158 = vector.load %arg15[%c0_82, %c0_83] : memref<1x64xf32, #tpu.memory_space<vmem>>, vector<1x64xf32>
    %159 = vector.broadcast %158 : vector<1x64xf32> to vector<16x64xf32>
    %160 = arith.addf %157, %159 : vector<16x64xf32>
    %cst_84 = arith.constant 5.000000e-01 : f32
    %161 = vector.broadcast %cst_84 : f32 to vector<16x64xf32>
    %162 = arith.mulf %161, %160 : vector<16x64xf32>
    %cst_85 = arith.constant 4.471500e-02 : f32
    %163 = vector.broadcast %cst_85 : f32 to vector<16x64xf32>
    %164 = arith.mulf %163, %160 : vector<16x64xf32>
    %165 = arith.mulf %164, %160 : vector<16x64xf32>
    %166 = arith.mulf %165, %160 : vector<16x64xf32>
    %167 = arith.addf %160, %166 : vector<16x64xf32>
    %cst_86 = arith.constant 0.797884583 : f32
    %168 = vector.broadcast %cst_86 : f32 to vector<16x64xf32>
    %169 = arith.mulf %168, %167 : vector<16x64xf32>
    %170 = math.tanh %169 : vector<16x64xf32>
    %cst_87 = arith.constant 1.000000e+00 : f32
    %171 = vector.broadcast %cst_87 : f32 to vector<16x64xf32>
    %172 = arith.addf %171, %170 : vector<16x64xf32>
    %173 = arith.mulf %162, %172 : vector<16x64xf32>
    %c0_88 = arith.constant 0 : index
    %c0_89 = arith.constant 0 : index
    %174 = vector.load %arg16[%c0_88, %c0_89] : memref<64x32xf32, #tpu.memory_space<vmem>>, vector<64x32xf32>
    %cst_90 = arith.constant dense<0.000000e+00> : vector<16x32xf32>
    %175 = tpu.matmul %173, %174, %cst_90 {dimension_numbers = #tpu.dot_dimension_numbers<[1], [0], [0], [1], [0, 0, 1, 1], [], []>} : vector<16x64xf32>, vector<64x32xf32>, vector<16x32xf32> -> vector<16x32xf32>
    %c0_91 = arith.constant 0 : index
    %c0_92 = arith.constant 0 : index
    %176 = vector.load %arg17[%c0_91, %c0_92] : memref<1x32xf32, #tpu.memory_space<vmem>>, vector<1x32xf32>
    %177 = vector.broadcast %176 : vector<1x32xf32> to vector<16x32xf32>
    %178 = arith.addf %175, %177 : vector<16x32xf32>
    %179 = arith.addf %133, %178 : vector<16x32xf32>
    %c0_93 = arith.constant 0 : index
    %c0_94 = arith.constant 0 : index
    %180 = vector.load %arg18[%c0_93, %c0_94] : memref<16x32xf32, #tpu.memory_space<vmem>>, vector<16x32xf32>
    tpu.vector_store %arg18[%c0_93, %c0_94], %179 {strides = array<i32>} : memref<16x32xf32, #tpu.memory_space<vmem>>, vector<16x32xf32>,
    return
  }
  func.func @transform_0(%arg0: i32) -> (i32, i32) {
    %c0_i32 = arith.constant 0 : i32
    %c0_i32_0 = arith.constant 0 : i32
    return %arg0, %c0_i32 : i32, i32
  }
  func.func @transform_1(%arg0: i32) -> (i32, i32) {
    %c0_i32 = arith.constant 0 : i32
    %c0_i32_0 = arith.constant 0 : i32
    %c0_i32_1 = arith.constant 0 : i32
    return %c0_i32, %c0_i32_0 : i32, i32
  }
  func.func @transform_2(%arg0: i32) -> (i32, i32) {
    %c0_i32 = arith.constant 0 : i32
    %c0_i32_0 = arith.constant 0 : i32
    %c0_i32_1 = arith.constant 0 : i32
    return %c0_i32, %c0_i32_0 : i32, i32
  }
  func.func @transform_3(%arg0: i32) -> (i32, i32, i32) {
    %c0_i32 = arith.constant 0 : i32
    %c0_i32_0 = arith.constant 0 : i32
    %c0_i32_1 = arith.constant 0 : i32
    %c0_i32_2 = arith.constant 0 : i32
    return %c0_i32, %c0_i32_0, %c0_i32_1 : i32, i32, i32
  }
  func.func @transform_4(%arg0: i32) -> (i32, i32, i32) {
    %c0_i32 = arith.constant 0 : i32
    %c0_i32_0 = arith.constant 0 : i32
    %c0_i32_1 = arith.constant 0 : i32
    %c0_i32_2 = arith.constant 0 : i32
    return %c0_i32, %c0_i32_0, %c0_i32_1 : i32, i32, i32
  }
  func.func @transform_5(%arg0: i32) -> (i32, i32, i32) {
    %c0_i32 = arith.constant 0 : i32
    %c0_i32_0 = arith.constant 0 : i32
    %c0_i32_1 = arith.constant 0 : i32
    %c0_i32_2 = arith.constant 0 : i32
    return %c0_i32, %c0_i32_0, %c0_i32_1 : i32, i32, i32
  }
  func.func @transform_6(%arg0: i32) -> (i32, i32, i32) {
    %c0_i32 = arith.constant 0 : i32
    %c0_i32_0 = arith.constant 0 : i32
    %c0_i32_1 = arith.constant 0 : i32
    %c0_i32_2 = arith.constant 0 : i32
    return %c0_i32, %c0_i32_0, %c0_i32_1 : i32, i32, i32
  }
  func.func @transform_7(%arg0: i32) -> (i32, i32, i32) {
    %c0_i32 = arith.constant 0 : i32
    %c0_i32_0 = arith.constant 0 : i32
    %c0_i32_1 = arith.constant 0 : i32
    %c0_i32_2 = arith.constant 0 : i32
    return %c0_i32, %c0_i32_0, %c0_i32_1 : i32, i32, i32
  }
  func.func @transform_8(%arg0: i32) -> (i32, i32, i32) {
    %c0_i32 = arith.constant 0 : i32
    %c0_i32_0 = arith.constant 0 : i32
    %c0_i32_1 = arith.constant 0 : i32
    %c0_i32_2 = arith.constant 0 : i32
    return %c0_i32, %c0_i32_0, %c0_i32_1 : i32, i32, i32
  }
  func.func @transform_9(%arg0: i32) -> (i32, i32, i32) {
    %c0_i32 = arith.constant 0 : i32
    %c0_i32_0 = arith.constant 0 : i32
    %c0_i32_1 = arith.constant 0 : i32
    %c0_i32_2 = arith.constant 0 : i32
    return %c0_i32, %c0_i32_0, %c0_i32_1 : i32, i32, i32
  }
  func.func @transform_10(%arg0: i32) -> (i32, i32) {
    %c0_i32 = arith.constant 0 : i32
    %c0_i32_0 = arith.constant 0 : i32
    %c0_i32_1 = arith.constant 0 : i32
    return %c0_i32, %c0_i32_0 : i32, i32
  }
  func.func @transform_11(%arg0: i32) -> (i32, i32) {
    %c0_i32 = arith.constant 0 : i32
    %c0_i32_0 = arith.constant 0 : i32
    %c0_i32_1 = arith.constant 0 : i32
    return %c0_i32, %c0_i32_0 : i32, i32
  }
  func.func @transform_12(%arg0: i32) -> (i32, i32) {
    %c0_i32 = arith.constant 0 : i32
    %c0_i32_0 = arith.constant 0 : i32
    %c0_i32_1 = arith.constant 0 : i32
    return %c0_i32, %c0_i32_0 : i32, i32
  }
  func.func @transform_13(%arg0: i32) -> (i32, i32) {
    %c0_i32 = arith.constant 0 : i32
    %c0_i32_0 = arith.constant 0 : i32
    %c0_i32_1 = arith.constant 0 : i32
    return %c0_i32, %c0_i32_0 : i32, i32
  }
  func.func @transform_14(%arg0: i32) -> (i32, i32) {
    %c0_i32 = arith.constant 0 : i32
    %c0_i32_0 = arith.constant 0 : i32
    %c0_i32_1 = arith.constant 0 : i32
    return %c0_i32, %c0_i32_0 : i32, i32
  }
  func.func @transform_15(%arg0: i32) -> (i32, i32) {
    %c0_i32 = arith.constant 0 : i32
    %c0_i32_0 = arith.constant 0 : i32
    %c0_i32_1 = arith.constant 0 : i32
    return %c0_i32, %c0_i32_0 : i32, i32
  }
  func.func @transform_16(%arg0: i32) -> (i32, i32) {
    %c0_i32 = arith.constant 0 : i32
    %c0_i32_0 = arith.constant 0 : i32
    %c0_i32_1 = arith.constant 0 : i32
    return %c0_i32, %c0_i32_0 : i32, i32
  }
  func.func @transform_17(%arg0: i32) -> (i32, i32) {
    %c0_i32 = arith.constant 0 : i32
    %c0_i32_0 = arith.constant 0 : i32
    return %arg0, %c0_i32 : i32, i32
  }
}

</mosaic_0001>

<llo_original>
// kernel: tpu_custom_call.1
$region0: #{tpu_custom_call.1}
  #allocation0 [shape = 'u32[]', space=smem, size = 0x4, offset = 0x4, fixed_abs, tag = 'smem constant byte address 0x4 - core index']
  #allocation1 [shape = 'u32[72,128]{1,0:T(1,128)}', space=vmem, size = 0x9000, scoped, tag = 'internal scratch']
  #allocation2 [shape = 'f32[16,32]{1,0:T(8,128)}', space=vmem, size = 0x2000, scoped, tag = 'scratch operand']
  %s0 = inlined_call_operand.vmem [shape: f32[16,32], index: 0, kind: input, shape index: {}]
  %s1 = inlined_call_operand.vmem [shape: f32[1,32], index: 1, kind: input, shape index: {}]
  %s2 = inlined_call_operand.vmem [shape: f32[1,32], index: 2, kind: input, shape index: {}]
  %s3 = inlined_call_operand.vmem [shape: f32[2,32,36], index: 3, kind: input, shape index: {}]
  %s4 = inlined_call_operand.vmem [shape: f32[2,1,36], index: 4, kind: input, shape index: {}]
  %s5 = inlined_call_operand.vmem [shape: f32[2,32,36], index: 5, kind: input, shape index: {}]
  %s6 = inlined_call_operand.vmem [shape: f32[2,1,36], index: 6, kind: input, shape index: {}]
  %s7 = inlined_call_operand.hbm [shape: f32[2,32,36], index: 7, kind: input, shape index: {}]
  %s8 = inlined_call_operand.vmem [shape: f32[2,1,36], index: 8, kind: input, shape index: {}]
  %s9 = inlined_call_operand.vmem [shape: f32[2,36,32], index: 9, kind: input, shape index: {}]
  %s10 = inlined_call_operand.hbm [shape: f32[1,32], index: 10, kind: input, shape index: {}]
  %s11 = inlined_call_operand.hbm [shape: f32[1,32], index: 11, kind: input, shape index: {}]
  %s12 = inlined_call_operand.vmem [shape: f32[1,32], index: 12, kind: input, shape index: {}]
  %s13 = inlined_call_operand.vmem [shape: f32[32,64], index: 13, kind: input, shape index: {}]
  %s14 = inlined_call_operand.vmem [shape: f32[1,64], index: 14, kind: input, shape index: {}]
  %s15 = inlined_call_operand.vmem [shape: f32[64,32], index: 15, kind: input, shape index: {}]
  %s16 = inlined_call_operand.vmem [shape: f32[1,32], index: 16, kind: input, shape index: {}]
  %s17 = inlined_call_operand.hbm [shape: f32[16,32], index: 17, kind: output, shape index: {}]
  %s18 = sld [smem:[#allocation0]]
  $region90: #{tpu_custom_call.1} parent=0
    _
  %s20 = ssub.s32 1, %s18
  %s21 = scalar_select 0, %s20, %s18
  $region1: #{tpu_custom_call.1} parent=0
    #allocation3 [shape = 'u8[32768]{0}', space=vmem, size = 0x8000, scoped, tag = 'input window, operand 7, single buffered']
    #allocation4 [shape = 's32[1]{0}', space=sflag, size = 0x4, scoped, tag = 'scoped memory for tpu_custom_call.1']
    #allocation5 [shape = 's32[1]{0}', space=sflag, size = 0x4, scoped, tag = 'scoped memory for tpu_custom_call.1']
    #allocation6 [shape = 'u8[512]{0}', space=vmem, size = 0x400, scoped, tag = 'input window, operand 10, single buffered']
    #allocation7 [shape = 's32[1]{0}', space=sflag, size = 0x4, scoped, tag = 'scoped memory for tpu_custom_call.1']
    #allocation8 [shape = 'u8[512]{0}', space=vmem, size = 0x400, scoped, tag = 'input window, operand 11, single buffered']
    #allocation9 [shape = 'u8[8192]{0}', space=vmem, size = 0x2000, scoped, tag = 'output window, operand 0, single buffered']
    %22 = vsyncpa [#allocation4], 0
    %23 = vsyncpa [#allocation7], 0
    %24 = vsyncpa [#allocation5], 0
    // Predicated region
    $region2: #{tpu_custom_call.1} parent=1 // pred_check
      _
    $region3: #{tpu_custom_call.1} parent=1 // pred_check_branch
      %26 = sbr.rel (0) target = $region5
    $region4: #{tpu_custom_call.1} parent=1 // pred_region
      _
    $region5: #{tpu_custom_call.1} parent=1 // pred_fallthru
      _
    // Predicated region
    $region6: #{tpu_custom_call.1} parent=1 // pred_check
      _
    $region7: #{tpu_custom_call.1} parent=1 // pred_check_branch
      %28 = sbr.rel (0) target = $region9
    $region8: #{tpu_custom_call.1} parent=1 // pred_region
      _
    $region9: #{tpu_custom_call.1} parent=1 // pred_fallthru
      _
    // Predicated region
    $region10: #{tpu_custom_call.1} parent=1 // pred_check
      _
    $region11: #{tpu_custom_call.1} parent=1 // pred_check_branch
      %30 = sbr.rel (0) target = $region13
    $region12: #{tpu_custom_call.1} parent=1 // pred_region
      _
    $region13: #{tpu_custom_call.1} parent=1 // pred_fallthru
      _
    // Predicated region
    $region14: #{tpu_custom_call.1} parent=1 // pred_check
      _
    $region15: #{tpu_custom_call.1} parent=1 // pred_check_branch
      %32 = sbr.rel (0) target = $region17
    $region16: #{tpu_custom_call.1} parent=1 // pred_region
      _
    $region17: #{tpu_custom_call.1} parent=1 // pred_fallthru
      _
    // Predicated region
    $region18: #{tpu_custom_call.1} parent=1 // pred_check
      _
    $region19: #{tpu_custom_call.1} parent=1 // pred_check_branch
      %34 = sbr.rel (0) target = $region21
    $region20: #{tpu_custom_call.1} parent=1 // pred_region
      _
    $region21: #{tpu_custom_call.1} parent=1 // pred_fallthru
      _
    // Predicated region
    $region22: #{tpu_custom_call.1} parent=1 // pred_check
      _
    $region23: #{tpu_custom_call.1} parent=1 // pred_check_branch
      %36 = sbr.rel (0) target = $region25
    $region24: #{tpu_custom_call.1} parent=1 // pred_region
      _
    $region25: #{tpu_custom_call.1} parent=1 // pred_fallthru
      _
    // Predicated region
    $region26: #{tpu_custom_call.1} parent=1 // pred_check
      _
    $region27: #{tpu_custom_call.1} parent=1 // pred_check_branch
      %38 = sbr.rel (0) target = $region29
    $region28: #{tpu_custom_call.1} parent=1 // pred_region
      _
    $region29: #{tpu_custom_call.1} parent=1 // pred_fallthru
      _
    // Predicated region
    $region30: #{tpu_custom_call.1} parent=1 // pred_check
      _
    $region31: #{tpu_custom_call.1} parent=1 // pred_check_branch
      %40 = sbr.rel (0) target = $region33
    $region32: #{tpu_custom_call.1} parent=1 // pred_region
      %42 = vsyncadd [#allocation4], 0
      %s43 = sshll.u32 %s7, 4
      %s44 = int_to_ptr.hbm [resolvable:$true] %s43
      %s45 = sshll.u32 [#allocation3], 4
      %s46 = int_to_ptr.vmem [resolvable:$true] %s45
      %51 = dma.hbm_to_vmem [thread:$0]  %s44, 1024, %s46, [#allocation4], 128, 128, 8
    $region33: #{tpu_custom_call.1} parent=1 // pred_fallthru
      _
    // Predicated region
    $region34: #{tpu_custom_call.1} parent=1 // pred_check
      _
    $region35: #{tpu_custom_call.1} parent=1 // pred_check_branch
      %53 = sbr.rel (0) target = $region37
    $region36: #{tpu_custom_call.1} parent=1 // pred_region
      _
    $region37: #{tpu_custom_call.1} parent=1 // pred_fallthru
      _
    // Predicated region
    $region38: #{tpu_custom_call.1} parent=1 // pred_check
      _
    $region39: #{tpu_custom_call.1} parent=1 // pred_check_branch
      %55 = sbr.rel (0) target = $region41
    $region40: #{tpu_custom_call.1} parent=1 // pred_region
      _
    $region41: #{tpu_custom_call.1} parent=1 // pred_fallthru
      _
    // Predicated region
    $region42: #{tpu_custom_call.1} parent=1 // pred_check
      _
    $region43: #{tpu_custom_call.1} parent=1 // pred_check_branch
      %57 = sbr.rel (0) target = $region45
    $region44: #{tpu_custom_call.1} parent=1 // pred_region
      %59 = vsyncadd [#allocation7], 0
      %s61 = sshll.u32 %s10, 4
      %s62 = int_to_ptr.hbm [resolvable:$true] %s61
      %s63 = sshll.u32 [#allocation6], 4
      %s64 = int_to_ptr.vmem [resolvable:$true] %s63
      %66 = dma.hbm_to_vmem [thread:$0]  %s62, 16, %s64, [#allocation7]
    $region45: #{tpu_custom_call.1} parent=1 // pred_fallthru
      _
    // Predicated region
    $region46: #{tpu_custom_call.1} parent=1 // pred_check
      _
    $region47: #{tpu_custom_call.1} parent=1 // pred_check_branch
      %68 = sbr.rel (0) target = $region49
    $region48: #{tpu_custom_call.1} parent=1 // pred_region
      %70 = vsyncadd [#allocation7], 0
      %s72 = sshll.u32 %s11, 4
      %s73 = int_to_ptr.hbm [resolvable:$true] %s72
      %s74 = sshll.u32 [#allocation8], 4
      %s75 = int_to_ptr.vmem [resolvable:$true] %s74
      %77 = dma.hbm_to_vmem [thread:$0]  %s73, 16, %s75, [#allocation7]
    $region49: #{tpu_custom_call.1} parent=1 // pred_fallthru
      _
    // Predicated region
    $region50: #{tpu_custom_call.1} parent=1 // pred_check
      _
    $region51: #{tpu_custom_call.1} parent=1 // pred_check_branch
      %79 = sbr.rel (0) target = $region53
    $region52: #{tpu_custom_call.1} parent=1 // pred_region
      _
    $region53: #{tpu_custom_call.1} parent=1 // pred_fallthru
      _
    // Predicated region
    $region54: #{tpu_custom_call.1} parent=1 // pred_check
      _
    $region55: #{tpu_custom_call.1} parent=1 // pred_check_branch
      %81 = sbr.rel (0) target = $region57
    $region56: #{tpu_custom_call.1} parent=1 // pred_region
      _
    $region57: #{tpu_custom_call.1} parent=1 // pred_fallthru
      _
    // Predicated region
    $region58: #{tpu_custom_call.1} parent=1 // pred_check
      _
    $region59: #{tpu_custom_call.1} parent=1 // pred_check_branch
      %83 = sbr.rel (0) target = $region61
    $region60: #{tpu_custom_call.1} parent=1 // pred_region
      _
    $region61: #{tpu_custom_call.1} parent=1 // pred_fallthru
      _
    // Predicated region
    $region62: #{tpu_custom_call.1} parent=1 // pred_check
      _
    $region63: #{tpu_custom_call.1} parent=1 // pred_check_branch
      %85 = sbr.rel (0) target = $region65
    $region64: #{tpu_custom_call.1} parent=1 // pred_region
      _
    $region65: #{tpu_custom_call.1} parent=1 // pred_fallthru
      _
    // Predicated region
    $region66: #{tpu_custom_call.1} parent=1 // pred_check
      _
    $region67: #{tpu_custom_call.1} parent=1 // pred_check_branch
      %87 = sbr.rel (0) target = $region69
    $region68: #{tpu_custom_call.1} parent=1 // pred_region
      _
    $region69: #{tpu_custom_call.1} parent=1 // pred_fallthru
      _
    // Predicated region
    $region70: #{tpu_custom_call.1} parent=1 // pred_check
      _
    $region71: #{tpu_custom_call.1} parent=1 // pred_check_branch
      %89 = sbr.rel (0) target = $region73
    $region72: #{tpu_custom_call.1} parent=1 // pred_region
      %91 = dma.done [#allocation4], 1024
    $region73: #{tpu_custom_call.1} parent=1 // pred_fallthru
      _
    // Predicated region
    $region74: #{tpu_custom_call.1} parent=1 // pred_check
      _
    $region75: #{tpu_custom_call.1} parent=1 // pred_check_branch
      %93 = sbr.rel (0) target = $region77
    $region76: #{tpu_custom_call.1} parent=1 // pred_region
      %95 = dma.done [#allocation7], 16
    $region77: #{tpu_custom_call.1} parent=1 // pred_fallthru
      _
    // Predicated region
    $region78: #{tpu_custom_call.1} parent=1 // pred_check
      _
    $region79: #{tpu_custom_call.1} parent=1 // pred_check_branch
      %97 = sbr.rel (0) target = $region81
    $region80: #{tpu_custom_call.1} parent=1 // pred_region
      %99 = dma.done [#allocation7], 16
    $region81: #{tpu_custom_call.1} parent=1 // pred_fallthru
      _
    %v100 = vld [vmem:[%s0] sm:$0xff]
    %v101 = vld [vmem:[%s0 + $0x8] sm:$0xff]
    %v102 = vld [vmem:[%s1] sm:$0x1]
    %v103 = vld [vmem:[%s2] sm:$0x1]
    %vm104 = vcmask 261120
    %v105 = vsel %vm104, %v100, 0.0
    %106 = vadd.xlane.f32.xlu0 %v105
    %v107 = vpop.xlane.xlu0 %106
    %v108 = vsel %vm104, %v101, 0.0
    %109 = vadd.xlane.f32.xlu0 %v108
    %v110 = vpop.xlane.xlu0 %109
    %v111 = vrcp.pop 32.0
    %v112 = vmul.f32 32.0, %v111
    %v113 = vsub.f32 1.0, %v112
    %v114 = vmul.f32 %v111, %v113
    %v115 = vadd.f32 %v111, %v114
    %vm116 = vweird.f32 %v111
    %v117 = vsel %vm116, %v111, %v115
    %v118 = vmul.f32 %v107, %v117
    %v119 = vmul.f32 %v110, %v117
    %v120 = vsub.f32 %v100, %v118
    %v121 = vsub.f32 %v101, %v119
    %v122 = vmul.f32 %v120, %v120
    %v123 = vmul.f32 %v121, %v121
    %v124 = vsel %vm104, %v122, 0.0
    %125 = vadd.xlane.f32.xlu0 %v124
    %v126 = vpop.xlane.xlu0 %125
    %v127 = vsel %vm104, %v123, 0.0
    %128 = vadd.xlane.f32.xlu0 %v127
    %v129 = vpop.xlane.xlu0 %128
    %v130 = vmul.f32 %v126, %v117
    %v131 = vmul.f32 %v129, %v117
    %v132 = vadd.f32 %v130, 1e-05
    %v133 = vadd.f32 %v131, 1e-05
    %v134 = vrsqrt.pop %v132
    %v135 = vmul.f32 %v134, %v132
    %v136 = vmul.f32 %v135, %v134
    %v137 = vmul.f32 0.5, %v136
    %v138 = vsub.f32 1.5, %v137
    %v139 = vmul.f32 %v134, %v138
    %vm140 = vweird.f32 %v132
    %vm141 = vweird.f32 %v134
    %vm142 = vmor %vm140, %vm141
    %v143 = vsel %vm142, %v134, %v139
    %v144 = vrsqrt.pop %v133
    %v145 = vmul.f32 %v144, %v133
    %v146 = vmul.f32 %v145, %v144
    %v147 = vmul.f32 0.5, %v146
    %v148 = vsub.f32 1.5, %v147
    %v149 = vmul.f32 %v144, %v148
    %vm150 = vweird.f32 %v133
    %vm151 = vweird.f32 %v144
    %vm152 = vmor %vm150, %vm151
    %v153 = vsel %vm152, %v144, %v149
    %v154 = vmul.f32 %v120, %v143
    %v155 = vmul.f32 %v121, %v153
    %v157 = vperm.slane %v102, 0
    %v159 = vmul.f32 %v154, %v157
    %v160 = vmul.f32 %v155, %v157
    %v162 = vperm.slane %v103, 0
    %v164 = vadd.f32 %v159, %v162
    %v165 = vadd.f32 %v160, %v162
    %166 = vst.msk [vmem:[#allocation2] sm:$0xff] %vm104, 0.0
    %167 = vst.msk [vmem:[#allocation2 + $0x8] sm:$0xff] %vm104, 0.0
    %v168 = vld [vmem:[%s3] sm:$0xff]
    %v169 = vld [vmem:[%s3 + $0x8] sm:$0xff]
    %v170 = vld [vmem:[%s3 + $0x10] sm:$0xff]
    %v171 = vld [vmem:[%s3 + $0x18] sm:$0xff]
    %v172 = vld [vmem:[%s4] sm:$0x1]
    %v174 = vperm.slane %v172, 0
    %v177 = vsel %vm104, %v164, 0
    %v180 = vsel %vm104, %v165, 0
    %182 = vmatpush.msra.mxu0 0.0
    %183 = vmatpush.msra.mxu0 0.0
    %184 = vmatpush.msra.mxu0 0.0
    %185 = vmatpush.msra.mxu0 0.0
    %186 = vmatpush.msra.mxu0 0.0
    %187 = vmatpush.msra.mxu0 0.0
    %188 = vmatpush.msra.mxu0 0.0
    %189 = vmatpush.msra.mxu0 0.0
    %190 = vmatpush.msra.mxu0 0.0
    %191 = vmatpush.msra.mxu0 0.0
    %192 = vmatpush.msra.mxu0 0.0
    %193 = vmatpush.msra.mxu0 0.0
    %194 = vmatpush.msra.mxu0 %v171
    %195 = vmatpush.msra.mxu0 %v170
    %196 = vmatpush.msra.mxu0 %v169
    %197 = vmatpush.msra.mxu0 %v168
    %198 = vmatmul.f32.gmra.mxu0 %v177
    %v199 = vpop.f32.mrf.mxu0
    %v200 = vadd.f32 %v174, %v199
    %201 = vmatmul.f32.gmra.mxu0 %v180
    %v202 = vpop.f32.mrf.mxu0
    %v203 = vadd.f32 %v174, %v202
    %204 = vdwg.mxu0
    %v205 = vld [vmem:[%s5] sm:$0xff]
    %v206 = vld [vmem:[%s5 + $0x8] sm:$0xff]
    %v207 = vld [vmem:[%s5 + $0x10] sm:$0xff]
    %v208 = vld [vmem:[%s5 + $0x18] sm:$0xff]
    %v209 = vld [vmem:[%s6] sm:$0x1]
    %v211 = vperm.slane %v209, 0
    %213 = vmatpush.msra.mxu0 0.0
    %214 = vmatpush.msra.mxu0 0.0
    %215 = vmatpush.msra.mxu0 0.0
    %216 = vmatpush.msra.mxu0 0.0
    %217 = vmatpush.msra.mxu0 0.0
    %218 = vmatpush.msra.mxu0 0.0
    %219 = vmatpush.msra.mxu0 0.0
    %220 = vmatpush.msra.mxu0 0.0
    %221 = vmatpush.msra.mxu0 0.0
    %222 = vmatpush.msra.mxu0 0.0
    %223 = vmatpush.msra.mxu0 0.0
    %224 = vmatpush.msra.mxu0 0.0
    %225 = vmatpush.msra.mxu0 %v208
    %226 = vmatpush.msra.mxu0 %v207
    %227 = vmatpush.msra.mxu0 %v206
    %228 = vmatpush.msra.mxu0 %v205
    %229 = vmatmul.f32.gmra.mxu0 %v177
    %v230 = vpop.f32.mrf.mxu0
    %v231 = vadd.f32 %v211, %v230
    %232 = vmatmul.f32.gmra.mxu0 %v180
    %v233 = vpop.f32.mrf.mxu0
    %v234 = vadd.f32 %v211, %v233
    %235 = vdwg.mxu0
    %v236 = vld [vmem:[#allocation3] sm:$0xff]
    %v237 = vld [vmem:[#allocation3 + $0x8] sm:$0xff]
    %v238 = vld [vmem:[#allocation3 + $0x10] sm:$0xff]
    %v239 = vld [vmem:[#allocation3 + $0x18] sm:$0xff]
    %v240 = vld [vmem:[%s8] sm:$0x1]
    %v242 = vperm.slane %v240, 0
    %244 = vmatpush.msra.mxu0 0.0
    %245 = vmatpush.msra.mxu0 0.0
    %246 = vmatpush.msra.mxu0 0.0
    %247 = vmatpush.msra.mxu0 0.0
    %248 = vmatpush.msra.mxu0 0.0
    %249 = vmatpush.msra.mxu0 0.0
    %250 = vmatpush.msra.mxu0 0.0
    %251 = vmatpush.msra.mxu0 0.0
    %252 = vmatpush.msra.mxu0 0.0
    %253 = vmatpush.msra.mxu0 0.0
    %254 = vmatpush.msra.mxu0 0.0
    %255 = vmatpush.msra.mxu0 0.0
    %256 = vmatpush.msra.mxu0 %v239
    %257 = vmatpush.msra.mxu0 %v238
    %258 = vmatpush.msra.mxu0 %v237
    %259 = vmatpush.msra.mxu0 %v236
    %260 = vmatmul.f32.gmra.mxu0 %v177
    %v261 = vpop.f32.mrf.mxu0
    %v262 = vadd.f32 %v242, %v261
    %263 = vmatmul.f32.gmra.mxu0 %v180
    %v264 = vpop.f32.mrf.mxu0
    %v265 = vadd.f32 %v242, %v264
    %266 = vdwg.mxu0
    %vm267 = vcmask 293888
    %v269 = vsel %vm267, %v200, 0
    %v272 = vsel %vm267, %v231, 0
    %274 = vmatpush.xpose.msra.mxu0 0.0
    %275 = vmatpush.xpose.msra.mxu0 0.0
    %276 = vmatpush.xpose.msra.mxu0 0.0
    %277 = vmatpush.xpose.msra.mxu0 0.0
    %278 = vmatpush.xpose.msra.mxu0 0.0
    %279 = vmatpush.xpose.msra.mxu0 0.0
    %280 = vmatpush.xpose.msra.mxu0 0.0
    %281 = vmatpush.xpose.msra.mxu0 0.0
    %282 = vmatpush.xpose.msra.mxu0 0.0
    %283 = vmatpush.xpose.msra.mxu0 0.0
    %284 = vmatpush.xpose.msra.mxu0 0.0
    %285 = vmatpush.xpose.msra.mxu0 0.0
    %286 = vmatpush.xpose.msra.mxu0 0.0
    %287 = vmatpush.xpose.msra.mxu0 0.0
    %288 = vmatpush.xpose.msra.mxu0 0.0
    %289 = vmatpush.xpose.msra.mxu0 %v272
    %290 = vmatmul.f32.gmra.mxu0 %v269
    %v291 = vpop.f32.mrf.mxu0
    %v292 = vadd.f32 0.0, %v291
    %293 = vdwg.mxu0
    %v295 = vsel %vm267, %v203, 0
    %v298 = vsel %vm267, %v234, 0
    %300 = vmatpush.xpose.msra.mxu0 0.0
    %301 = vmatpush.xpose.msra.mxu0 0.0
    %302 = vmatpush.xpose.msra.mxu0 0.0
    %303 = vmatpush.xpose.msra.mxu0 0.0
    %304 = vmatpush.xpose.msra.mxu0 0.0
    %305 = vmatpush.xpose.msra.mxu0 0.0
    %306 = vmatpush.xpose.msra.mxu0 0.0
    %307 = vmatpush.xpose.msra.mxu0 0.0
    %308 = vmatpush.xpose.msra.mxu0 0.0
    %309 = vmatpush.xpose.msra.mxu0 0.0
    %310 = vmatpush.xpose.msra.mxu0 0.0
    %311 = vmatpush.xpose.msra.mxu0 0.0
    %312 = vmatpush.xpose.msra.mxu0 0.0
    %313 = vmatpush.xpose.msra.mxu0 0.0
    %314 = vmatpush.xpose.msra.mxu0 0.0
    %315 = vmatpush.xpose.msra.mxu0 %v298
    %316 = vmatmul.f32.gmra.mxu0 %v295
    %v317 = vpop.f32.mrf.mxu0
    %v318 = vadd.f32 0.0, %v317
    %319 = vdwg.mxu0
    %v320 = vmul.f32 %v292, 0.16666667
    %v321 = vmul.f32 %v318, 0.16666667
    %vm322 = vcmask 64512
    %v323 = vsel %vm322, %v320, -inf
    %324 = vmax.xlane.f32.xlu0 %v323
    %v325 = vpop.xlane.xlu0 %324
    %v326 = vsel %vm322, %v321, -inf
    %327 = vmax.xlane.f32.xlu0 %v326
    %v328 = vpop.xlane.xlu0 %327
    %v329 = vsub.f32 %v320, %v325
    %v330 = vsub.f32 %v321, %v328
    %v331 = vmul.f32 %v329, 1.442695
    %v332 = vpow.pop %v331
    %v333 = vmul.f32 %v330, 1.442695
    %v334 = vpow.pop %v333
    %v335 = vsel %vm322, %v332, 0.0
    %336 = vadd.xlane.f32.xlu0 %v335
    %v337 = vpop.xlane.xlu0 %336
    %v338 = vsel %vm322, %v334, 0.0
    %339 = vadd.xlane.f32.xlu0 %v338
    %v340 = vpop.xlane.xlu0 %339
    %v341 = vrcp.pop %v337
    %v342 = vrcp.pop %v340
    %v343 = vmul.f32 %v332, %v341
    %v344 = vmul.f32 %v334, %v342
    %v346 = vsel %vm322, %v343, 0
    %348 = vmatpush.msra.mxu0 0.0
    %349 = vmatpush.msra.mxu0 0.0
    %350 = vmatpush.msra.mxu0 0.0
    %351 = vmatpush.msra.mxu0 0.0
    %352 = vmatpush.msra.mxu0 0.0
    %353 = vmatpush.msra.mxu0 0.0
    %354 = vmatpush.msra.mxu0 0.0
    %355 = vmatpush.msra.mxu0 0.0
    %356 = vmatpush.msra.mxu0 0.0
    %357 = vmatpush.msra.mxu0 0.0
    %358 = vmatpush.msra.mxu0 0.0
    %359 = vmatpush.msra.mxu0 0.0
    %360 = vmatpush.msra.mxu0 0.0
    %361 = vmatpush.msra.mxu0 0.0
    %362 = vmatpush.msra.mxu0 0.0
    %363 = vmatpush.msra.mxu0 %v262
    %364 = vmatmul.f32.gmra.mxu0 %v346
    %v365 = vpop.f32.mrf.mxu0
    %v366 = vadd.f32 0.0, %v365
    %367 = vdwg.mxu0
    %v369 = vsel %vm322, %v344, 0
    %371 = vmatpush.msra.mxu0 0.0
    %372 = vmatpush.msra.mxu0 0.0
    %373 = vmatpush.msra.mxu0 0.0
    %374 = vmatpush.msra.mxu0 0.0
    %375 = vmatpush.msra.mxu0 0.0
    %376 = vmatpush.msra.mxu0 0.0
    %377 = vmatpush.msra.mxu0 0.0
    %378 = vmatpush.msra.mxu0 0.0
    %379 = vmatpush.msra.mxu0 0.0
    %380 = vmatpush.msra.mxu0 0.0
    %381 = vmatpush.msra.mxu0 0.0
    %382 = vmatpush.msra.mxu0 0.0
    %383 = vmatpush.msra.mxu0 0.0
    %384 = vmatpush.msra.mxu0 0.0
    %385 = vmatpush.msra.mxu0 0.0
    %386 = vmatpush.msra.mxu0 %v265
    %387 = vmatmul.f32.gmra.mxu0 %v369
    %v388 = vpop.f32.mrf.mxu0
    %v389 = vadd.f32 0.0, %v388
    %390 = vdwg.mxu0
    %v391 = vld [vmem:[#allocation2] sm:$0xff]
    %v392 = vld [vmem:[#allocation2 + $0x8] sm:$0xff]
    %v393 = vld [vmem:[%s9] sm:$0xff]
    %v394 = vld [vmem:[%s9 + $0x8] sm:$0xff]
    %v395 = vld [vmem:[%s9 + $0x10] sm:$0xff]
    %v396 = vld [vmem:[%s9 + $0x18] sm:$0xff]
    %v397 = vld [vmem:[%s9 + $0x20] sm:$0xf]
    %v399 = vsel %vm267, %v366, 0
    %v402 = vsel %vm267, %v389, 0
    %vm404 = vcmask 1043456
    %v406 = vsel %vm404, %v397, 0
    %408 = vmatpush.msra.mxu0 0.0
    %409 = vmatpush.msra.mxu0 0.0
    %410 = vmatpush.msra.mxu0 0.0
    %411 = vmatpush.msra.mxu0 0.0
    %412 = vmatpush.msra.mxu0 0.0
    %413 = vmatpush.msra.mxu0 0.0
    %414 = vmatpush.msra.mxu0 0.0
    %415 = vmatpush.msra.mxu0 0.0
    %416 = vmatpush.msra.mxu0 0.0
    %417 = vmatpush.msra.mxu0 0.0
    %418 = vmatpush.msra.mxu0 0.0
    %419 = vmatpush.msra.mxu0 %v406
    %420 = vmatpush.msra.mxu0 %v396
    %421 = vmatpush.msra.mxu0 %v395
    %422 = vmatpush.msra.mxu0 %v394
    %423 = vmatpush.msra.mxu0 %v393
    %424 = vmatmul.f32.gmra.mxu0 %v399
    %v425 = vpop.f32.mrf.mxu0
    %v426 = vadd.f32 0.0, %v425
    %427 = vmatmul.f32.gmra.mxu0 %v402
    %v428 = vpop.f32.mrf.mxu0
    %v429 = vadd.f32 0.0, %v428
    %430 = vdwg.mxu0
    %v431 = vadd.f32 %v391, %v426
    %v432 = vadd.f32 %v392, %v429
    %433 = vst.msk [vmem:[#allocation2] sm:$0xff] %vm104, %v431
    %434 = vst.msk [vmem:[#allocation2 + $0x8] sm:$0xff] %vm104, %v432
    %s435 = scalar_lea.vmem %s3, 32
    %v436 = vld [vmem:[%s435] sm:$0xff]
    %v437 = vld [vmem:[%s435 + $0x8] sm:$0xff]
    %v438 = vld [vmem:[%s435 + $0x10] sm:$0xff]
    %v439 = vld [vmem:[%s435 + $0x18] sm:$0xff]
    %s440 = scalar_lea.vmem %s4, 1
    %v441 = vld [vmem:[%s440] sm:$0x1]
    %v443 = vperm.slane %v441, 0
    %445 = vmatpush.msra.mxu0 0.0
    %446 = vmatpush.msra.mxu0 0.0
    %447 = vmatpush.msra.mxu0 0.0
    %448 = vmatpush.msra.mxu0 0.0
    %449 = vmatpush.msra.mxu0 0.0
    %450 = vmatpush.msra.mxu0 0.0
    %451 = vmatpush.msra.mxu0 0.0
    %452 = vmatpush.msra.mxu0 0.0
    %453 = vmatpush.msra.mxu0 0.0
    %454 = vmatpush.msra.mxu0 0.0
    %455 = vmatpush.msra.mxu0 0.0
    %456 = vmatpush.msra.mxu0 0.0
    %457 = vmatpush.msra.mxu0 %v439
    %458 = vmatpush.msra.mxu0 %v438
    %459 = vmatpush.msra.mxu0 %v437
    %460 = vmatpush.msra.mxu0 %v436
    %461 = vmatmul.f32.gmra.mxu0 %v177
    %v462 = vpop.f32.mrf.mxu0
    %v463 = vadd.f32 %v443, %v462
    %464 = vmatmul.f32.gmra.mxu0 %v180
    %v465 = vpop.f32.mrf.mxu0
    %v466 = vadd.f32 %v443, %v465
    %467 = vdwg.mxu0
    %s468 = scalar_lea.vmem %s5, 32
    %v469 = vld [vmem:[%s468] sm:$0xff]
    %v470 = vld [vmem:[%s468 + $0x8] sm:$0xff]
    %v471 = vld [vmem:[%s468 + $0x10] sm:$0xff]
    %v472 = vld [vmem:[%s468 + $0x18] sm:$0xff]
    %s473 = scalar_lea.vmem %s6, 1
    %v474 = vld [vmem:[%s473] sm:$0x1]
    %v476 = vperm.slane %v474, 0
    %478 = vmatpush.msra.mxu0 0.0
    %479 = vmatpush.msra.mxu0 0.0
    %480 = vmatpush.msra.mxu0 0.0
    %481 = vmatpush.msra.mxu0 0.0
    %482 = vmatpush.msra.mxu0 0.0
    %483 = vmatpush.msra.mxu0 0.0
    %484 = vmatpush.msra.mxu0 0.0
    %485 = vmatpush.msra.mxu0 0.0
    %486 = vmatpush.msra.mxu0 0.0
    %487 = vmatpush.msra.mxu0 0.0
    %488 = vmatpush.msra.mxu0 0.0
    %489 = vmatpush.msra.mxu0 0.0
    %490 = vmatpush.msra.mxu0 %v472
    %491 = vmatpush.msra.mxu0 %v471
    %492 = vmatpush.msra.mxu0 %v470
    %493 = vmatpush.msra.mxu0 %v469
    %494 = vmatmul.f32.gmra.mxu0 %v177
    %v495 = vpop.f32.mrf.mxu0
    %v496 = vadd.f32 %v476, %v495
    %497 = vmatmul.f32.gmra.mxu0 %v180
    %v498 = vpop.f32.mrf.mxu0
    %v499 = vadd.f32 %v476, %v498
    %500 = vdwg.mxu0
    %s501 = scalar_lea.vmem [#allocation3], 32
    %v502 = vld [vmem:[%s501] sm:$0xff]
    %v503 = vld [vmem:[%s501 + $0x8] sm:$0xff]
    %v504 = vld [vmem:[%s501 + $0x10] sm:$0xff]
    %v505 = vld [vmem:[%s501 + $0x18] sm:$0xff]
    %s506 = scalar_lea.vmem %s8, 1
    %v507 = vld [vmem:[%s506] sm:$0x1]
    %v509 = vperm.slane %v507, 0
    %511 = vmatpush.msra.mxu0 0.0
    %512 = vmatpush.msra.mxu0 0.0
    %513 = vmatpush.msra.mxu0 0.0
    %514 = vmatpush.msra.mxu0 0.0
    %515 = vmatpush.msra.mxu0 0.0
    %516 = vmatpush.msra.mxu0 0.0
    %517 = vmatpush.msra.mxu0 0.0
    %518 = vmatpush.msra.mxu0 0.0
    %519 = vmatpush.msra.mxu0 0.0
    %520 = vmatpush.msra.mxu0 0.0
    %521 = vmatpush.msra.mxu0 0.0
    %522 = vmatpush.msra.mxu0 0.0
    %523 = vmatpush.msra.mxu0 %v505
    %524 = vmatpush.msra.mxu0 %v504
    %525 = vmatpush.msra.mxu0 %v503
    %526 = vmatpush.msra.mxu0 %v502
    %527 = vmatmul.f32.gmra.mxu0 %v177
    %v528 = vpop.f32.mrf.mxu0
    %v529 = vadd.f32 %v509, %v528
    %530 = vmatmul.f32.gmra.mxu0 %v180
    %v531 = vpop.f32.mrf.mxu0
    %v532 = vadd.f32 %v509, %v531
    %533 = vdwg.mxu0
    %v535 = vsel %vm267, %v463, 0
    %v538 = vsel %vm267, %v496, 0
    %540 = vmatpush.xpose.msra.mxu0 0.0
    %541 = vmatpush.xpose.msra.mxu0 0.0
    %542 = vmatpush.xpose.msra.mxu0 0.0
    %543 = vmatpush.xpose.msra.mxu0 0.0
    %544 = vmatpush.xpose.msra.mxu0 0.0
    %545 = vmatpush.xpose.msra.mxu0 0.0
    %546 = vmatpush.xpose.msra.mxu0 0.0
    %547 = vmatpush.xpose.msra.mxu0 0.0
    %548 = vmatpush.xpose.msra.mxu0 0.0
    %549 = vmatpush.xpose.msra.mxu0 0.0
    %550 = vmatpush.xpose.msra.mxu0 0.0
    %551 = vmatpush.xpose.msra.mxu0 0.0
    %552 = vmatpush.xpose.msra.mxu0 0.0
    %553 = vmatpush.xpose.msra.mxu0 0.0
    %554 = vmatpush.xpose.msra.mxu0 0.0
    %555 = vmatpush.xpose.msra.mxu0 %v538
    %556 = vmatmul.f32.gmra.mxu0 %v535
    %v557 = vpop.f32.mrf.mxu0
    %v558 = vadd.f32 0.0, %v557
    %559 = vdwg.mxu0
    %v561 = vsel %vm267, %v466, 0
    %v564 = vsel %vm267, %v499, 0
    %566 = vmatpush.xpose.msra.mxu0 0.0
    %567 = vmatpush.xpose.msra.mxu0 0.0
    %568 = vmatpush.xpose.msra.mxu0 0.0
    %569 = vmatpush.xpose.msra.mxu0 0.0
    %570 = vmatpush.xpose.msra.mxu0 0.0
    %571 = vmatpush.xpose.msra.mxu0 0.0
    %572 = vmatpush.xpose.msra.mxu0 0.0
    %573 = vmatpush.xpose.msra.mxu0 0.0
    %574 = vmatpush.xpose.msra.mxu0 0.0
    %575 = vmatpush.xpose.msra.mxu0 0.0
    %576 = vmatpush.xpose.msra.mxu0 0.0
    %577 = vmatpush.xpose.msra.mxu0 0.0
    %578 = vmatpush.xpose.msra.mxu0 0.0
    %579 = vmatpush.xpose.msra.mxu0 0.0
    %580 = vmatpush.xpose.msra.mxu0 0.0
    %581 = vmatpush.xpose.msra.mxu0 %v564
    %582 = vmatmul.f32.gmra.mxu0 %v561
    %v583 = vpop.f32.mrf.mxu0
    %v584 = vadd.f32 0.0, %v583
    %585 = vdwg.mxu0
    %v586 = vmul.f32 %v558, 0.16666667
    %v587 = vmul.f32 %v584, 0.16666667
    %v588 = vsel %vm322, %v586, -inf
    %589 = vmax.xlane.f32.xlu0 %v588
    %v590 = vpop.xlane.xlu0 %589
    %v591 = vsel %vm322, %v587, -inf
    %592 = vmax.xlane.f32.xlu0 %v591
    %v593 = vpop.xlane.xlu0 %592
    %v594 = vsub.f32 %v586, %v590
    %v595 = vsub.f32 %v587, %v593
    %v596 = vmul.f32 %v594, 1.442695
    %v597 = vpow.pop %v596
    %v598 = vmul.f32 %v595, 1.442695
    %v599 = vpow.pop %v598
    %v600 = vsel %vm322, %v597, 0.0
    %601 = vadd.xlane.f32.xlu0 %v600
    %v602 = vpop.xlane.xlu0 %601
    %v603 = vsel %vm322, %v599, 0.0
    %604 = vadd.xlane.f32.xlu0 %v603
    %v605 = vpop.xlane.xlu0 %604
    %v606 = vrcp.pop %v602
    %v607 = vrcp.pop %v605
    %v608 = vmul.f32 %v597, %v606
    %v609 = vmul.f32 %v599, %v607
    %v611 = vsel %vm322, %v608, 0
    %613 = vmatpush.msra.mxu0 0.0
    %614 = vmatpush.msra.mxu0 0.0
    %615 = vmatpush.msra.mxu0 0.0
    %616 = vmatpush.msra.mxu0 0.0
    %617 = vmatpush.msra.mxu0 0.0
    %618 = vmatpush.msra.mxu0 0.0
    %619 = vmatpush.msra.mxu0 0.0
    %620 = vmatpush.msra.mxu0 0.0
    %621 = vmatpush.msra.mxu0 0.0
    %622 = vmatpush.msra.mxu0 0.0
    %623 = vmatpush.msra.mxu0 0.0
    %624 = vmatpush.msra.mxu0 0.0
    %625 = vmatpush.msra.mxu0 0.0
    %626 = vmatpush.msra.mxu0 0.0
    %627 = vmatpush.msra.mxu0 0.0
    %628 = vmatpush.msra.mxu0 %v529
    %629 = vmatmul.f32.gmra.mxu0 %v611
    %v630 = vpop.f32.mrf.mxu0
    %v631 = vadd.f32 0.0, %v630
    %632 = vdwg.mxu0
    %v634 = vsel %vm322, %v609, 0
    %636 = vmatpush.msra.mxu0 0.0
    %637 = vmatpush.msra.mxu0 0.0
    %638 = vmatpush.msra.mxu0 0.0
    %639 = vmatpush.msra.mxu0 0.0
    %640 = vmatpush.msra.mxu0 0.0
    %641 = vmatpush.msra.mxu0 0.0
    %642 = vmatpush.msra.mxu0 0.0
    %643 = vmatpush.msra.mxu0 0.0
    %644 = vmatpush.msra.mxu0 0.0
    %645 = vmatpush.msra.mxu0 0.0
    %646 = vmatpush.msra.mxu0 0.0
    %647 = vmatpush.msra.mxu0 0.0
    %648 = vmatpush.msra.mxu0 0.0
    %649 = vmatpush.msra.mxu0 0.0
    %650 = vmatpush.msra.mxu0 0.0
    %651 = vmatpush.msra.mxu0 %v532
    %652 = vmatmul.f32.gmra.mxu0 %v634
    %v653 = vpop.f32.mrf.mxu0
    %v654 = vadd.f32 0.0, %v653
    %655 = vdwg.mxu0
    %v656 = vld [vmem:[#allocation2] sm:$0xff]
    %v657 = vld [vmem:[#allocation2 + $0x8] sm:$0xff]
    %s658 = scalar_lea.vmem %s9, 40
    %v659 = vld [vmem:[%s658] sm:$0xff]
    %v660 = vld [vmem:[%s658 + $0x8] sm:$0xff]
    %v661 = vld [vmem:[%s658 + $0x10] sm:$0xff]
    %v662 = vld [vmem:[%s658 + $0x18] sm:$0xff]
    %v663 = vld [vmem:[%s658 + $0x20] sm:$0xf]
    %v665 = vsel %vm267, %v631, 0
    %v668 = vsel %vm267, %v654, 0
    %v671 = vsel %vm404, %v663, 0
    %673 = vmatpush.msra.mxu0 0.0
    %674 = vmatpush.msra.mxu0 0.0
    %675 = vmatpush.msra.mxu0 0.0
    %676 = vmatpush.msra.mxu0 0.0
    %677 = vmatpush.msra.mxu0 0.0
    %678 = vmatpush.msra.mxu0 0.0
    %679 = vmatpush.msra.mxu0 0.0
    %680 = vmatpush.msra.mxu0 0.0
    %681 = vmatpush.msra.mxu0 0.0
    %682 = vmatpush.msra.mxu0 0.0
    %683 = vmatpush.msra.mxu0 0.0
    %684 = vmatpush.msra.mxu0 %v671
    %685 = vmatpush.msra.mxu0 %v662
    %686 = vmatpush.msra.mxu0 %v661
    %687 = vmatpush.msra.mxu0 %v660
    %688 = vmatpush.msra.mxu0 %v659
    %689 = vmatmul.f32.gmra.mxu0 %v665
    %v690 = vpop.f32.mrf.mxu0
    %v691 = vadd.f32 0.0, %v690
    %692 = vmatmul.f32.gmra.mxu0 %v668
    %v693 = vpop.f32.mrf.mxu0
    %v694 = vadd.f32 0.0, %v693
    %695 = vdwg.mxu0
    %v696 = vadd.f32 %v656, %v691
    %v697 = vadd.f32 %v657, %v694
    %698 = vst.msk [vmem:[#allocation2] sm:$0xff] %vm104, %v696
    %699 = vst.msk [vmem:[#allocation2 + $0x8] sm:$0xff] %vm104, %v697
    %v700 = vld [vmem:[#allocation2] sm:$0xff]
    %v701 = vld [vmem:[#allocation2 + $0x8] sm:$0xff]
    %v702 = vadd.f32 %v100, %v700
    %v703 = vadd.f32 %v101, %v701
    %v704 = vld [vmem:[#allocation6] sm:$0x1]
    %v706 = vperm.slane %v704, 0
    %v708 = vadd.f32 %v702, %v706
    %v709 = vadd.f32 %v703, %v706
    %v710 = vld [vmem:[#allocation8] sm:$0x1]
    %v711 = vld [vmem:[%s12] sm:$0x1]
    %v712 = vsel %vm104, %v708, 0.0
    %713 = vadd.xlane.f32.xlu0 %v712
    %v714 = vpop.xlane.xlu0 %713
    %v715 = vsel %vm104, %v709, 0.0
    %716 = vadd.xlane.f32.xlu0 %v715
    %v717 = vpop.xlane.xlu0 %716
    %v718 = vmul.f32 %v714, %v117
    %v719 = vmul.f32 %v717, %v117
    %v720 = vsub.f32 %v708, %v718
    %v721 = vsub.f32 %v709, %v719
    %v722 = vmul.f32 %v720, %v720
    %v723 = vmul.f32 %v721, %v721
    %v724 = vsel %vm104, %v722, 0.0
    %725 = vadd.xlane.f32.xlu0 %v724
    %v726 = vpop.xlane.xlu0 %725
    %v727 = vsel %vm104, %v723, 0.0
    %728 = vadd.xlane.f32.xlu0 %v727
    %v729 = vpop.xlane.xlu0 %728
    %v730 = vmul.f32 %v726, %v117
    %v731 = vmul.f32 %v729, %v117
    %v732 = vadd.f32 %v730, 1e-05
    %v733 = vadd.f32 %v731, 1e-05
    %v734 = vrsqrt.pop %v732
    %v735 = vmul.f32 %v734, %v732
    %v736 = vmul.f32 %v735, %v734
    %v737 = vmul.f32 0.5, %v736
    %v738 = vsub.f32 1.5, %v737
    %v739 = vmul.f32 %v734, %v738
    %vm740 = vweird.f32 %v732
    %vm741 = vweird.f32 %v734
    %vm742 = vmor %vm740, %vm741
    %v743 = vsel %vm742, %v734, %v739
    %v744 = vrsqrt.pop %v733
    %v745 = vmul.f32 %v744, %v733
    %v746 = vmul.f32 %v745, %v744
    %v747 = vmul.f32 0.5, %v746
    %v748 = vsub.f32 1.5, %v747
    %v749 = vmul.f32 %v744, %v748
    %vm750 = vweird.f32 %v733
    %vm751 = vweird.f32 %v744
    %vm752 = vmor %vm750, %vm751
    %v753 = vsel %vm752, %v744, %v749
    %v754 = vmul.f32 %v720, %v743
    %v755 = vmul.f32 %v721, %v753
    %v757 = vperm.slane %v710, 0
    %v759 = vmul.f32 %v754, %v757
    %v760 = vmul.f32 %v755, %v757
    %v762 = vperm.slane %v711, 0
    %v764 = vadd.f32 %v759, %v762
    %v765 = vadd.f32 %v760, %v762
    %v766 = vld [vmem:[%s13] sm:$0xff]
    %v767 = vld [vmem:[%s13 + $0x8] sm:$0xff]
    %v768 = vld [vmem:[%s13 + $0x10] sm:$0xff]
    %v769 = vld [vmem:[%s13 + $0x18] sm:$0xff]
    %v770 = vld [vmem:[%s14] sm:$0x1]
    %v772 = vperm.slane %v770, 0
    %v775 = vsel %vm104, %v764, 0
    %v778 = vsel %vm104, %v765, 0
    %780 = vmatpush.msra.mxu0 0.0
    %781 = vmatpush.msra.mxu0 0.0
    %782 = vmatpush.msra.mxu0 0.0
    %783 = vmatpush.msra.mxu0 0.0
    %784 = vmatpush.msra.mxu0 0.0
    %785 = vmatpush.msra.mxu0 0.0
    %786 = vmatpush.msra.mxu0 0.0
    %787 = vmatpush.msra.mxu0 0.0
    %788 = vmatpush.msra.mxu0 0.0
    %789 = vmatpush.msra.mxu0 0.0
    %790 = vmatpush.msra.mxu0 0.0
    %791 = vmatpush.msra.mxu0 0.0
    %792 = vmatpush.msra.mxu0 %v769
    %793 = vmatpush.msra.mxu0 %v768
    %794 = vmatpush.msra.mxu0 %v767
    %795 = vmatpush.msra.mxu0 %v766
    %796 = vmatmul.f32.gmra.mxu0 %v775
    %v797 = vpop.f32.mrf.mxu0
    %v798 = vadd.f32 %v772, %v797
    %799 = vmatmul.f32.gmra.mxu0 %v778
    %v800 = vpop.f32.mrf.mxu0
    %v801 = vadd.f32 %v772, %v800
    %802 = vdwg.mxu0
    %v803 = vmul.f32 %v798, 0.5
    %v804 = vmul.f32 %v801, 0.5
    %v805 = vmul.f32 %v798, 0.044715
    %v806 = vmul.f32 %v801, 0.044715
    %v807 = vmul.f32 %v805, %v798
    %v808 = vmul.f32 %v806, %v801
    %v809 = vmul.f32 %v807, %v798
    %v810 = vmul.f32 %v808, %v801
    %v811 = vadd.f32 %v798, %v809
    %v812 = vadd.f32 %v801, %v810
    %v813 = vmul.f32 %v811, 0.7978846
    %v814 = vmul.f32 %v812, 0.7978846
    %v815 = vtanh.pop %v813
    %v816 = vtanh.pop %v814
    %v817 = vadd.f32 %v815, 1.0
    %v818 = vadd.f32 %v816, 1.0
    %v819 = vmul.f32 %v803, %v817
    %v820 = vmul.f32 %v804, %v818
    %v821 = vld [vmem:[%s15] sm:$0xff]
    %v822 = vld [vmem:[%s15 + $0x8] sm:$0xff]
    %v823 = vld [vmem:[%s15 + $0x10] sm:$0xff]
    %v824 = vld [vmem:[%s15 + $0x18] sm:$0xff]
    %v825 = vld [vmem:[%s15 + $0x20] sm:$0xff]
    %v826 = vld [vmem:[%s15 + $0x28] sm:$0xff]
    %v827 = vld [vmem:[%s15 + $0x30] sm:$0xff]
    %v828 = vld [vmem:[%s15 + $0x38] sm:$0xff]
    %v829 = vld [vmem:[%s16] sm:$0x1]
    %v831 = vperm.slane %v829, 0
    %vm833 = vcmask 523264
    %v835 = vsel %vm833, %v819, 0
    %v838 = vsel %vm833, %v820, 0
    %840 = vmatpush.msra.mxu0 0.0
    %841 = vmatpush.msra.mxu0 0.0
    %842 = vmatpush.msra.mxu0 0.0
    %843 = vmatpush.msra.mxu0 0.0
    %844 = vmatpush.msra.mxu0 0.0
    %845 = vmatpush.msra.mxu0 0.0
    %846 = vmatpush.msra.mxu0 0.0
    %847 = vmatpush.msra.mxu0 0.0
    %848 = vmatpush.msra.mxu0 %v828
    %849 = vmatpush.msra.mxu0 %v827
    %850 = vmatpush.msra.mxu0 %v826
    %851 = vmatpush.msra.mxu0 %v825
    %852 = vmatpush.msra.mxu0 %v824
    %853 = vmatpush.msra.mxu0 %v823
    %854 = vmatpush.msra.mxu0 %v822
    %855 = vmatpush.msra.mxu0 %v821
    %856 = vmatmul.f32.gmra.mxu0 %v835
    %v857 = vpop.f32.mrf.mxu0
    %v858 = vadd.f32 %v831, %v857
    %859 = vmatmul.f32.gmra.mxu0 %v838
    %v860 = vpop.f32.mrf.mxu0
    %v861 = vadd.f32 %v831, %v860
    %862 = vdwg.mxu0
    %v863 = vadd.f32 %v708, %v858
    %v864 = vadd.f32 %v709, %v861
    %865 = vst.msk [vmem:[#allocation9] sm:$0xff] %vm104, %v863
    %866 = vst.msk [vmem:[#allocation9 + $0x8] sm:$0xff] %vm104, %v864
    // Predicated region
    $region82: #{tpu_custom_call.1} parent=1 // pred_check
      _
    $region83: #{tpu_custom_call.1} parent=1 // pred_check_branch
      %868 = sbr.rel (0) target = $region85
    $region84: #{tpu_custom_call.1} parent=1 // pred_region
      %870 = vsyncadd [#allocation5], 0
      %s871 = sshll.u32 [#allocation9], 4
      %s872 = int_to_ptr.vmem [resolvable:$true] %s871
      %s873 = sshll.u32 %s17, 4
      %s874 = int_to_ptr.hbm [resolvable:$true] %s873
      %879 = dma.vmem_to_hbm [thread:$0]  %s872, 256, %s874, [#allocation5], 128, 128, 8
    $region85: #{tpu_custom_call.1} parent=1 // pred_fallthru
      _
    // Predicated region
    $region86: #{tpu_custom_call.1} parent=1 // pred_check
      _
    $region87: #{tpu_custom_call.1} parent=1 // pred_check_branch
      %881 = sbr.rel (0) target = $region89
    $region88: #{tpu_custom_call.1} parent=1 // pred_region
      %883 = dma.done [#allocation5], 256
    $region89: #{tpu_custom_call.1} parent=1 // pred_fallthru
      _
    %884 = vsyncpa [#allocation4], 1
    %885 = vsyncpa [#allocation7], 1
    %886 = vsyncpa [#allocation5], 1

</llo_original>
